<compile_context>
chip_gen: v5e
topology: v5e:2x2
jax: 0.10.0
libtpu: 0.0.40
codegen_flags: <defaults>
</compile_context>

<pallas_src>
import functools

import jax
import jax.numpy as jnp
from jax.experimental import pallas as pl
from jax.experimental.pallas import tpu as pltpu


def _lstm_chunk_kernel(x_ref, len_ref, wih_ref, whh_ref, b_ref,
                       out_ref, hn_ref, cn_ref,
                       xg_sc, h_sc, c_sc, *, num_chunks):
    """One (batch-block, time-chunk) grid step of a masked LSTM.

    grid = (num_batch_blocks ["parallel"], num_chunks ["arbitrary"])

    x_ref   : (Tc, Bb, E)    bf16  embedded inputs, time-major
    len_ref : (Bb, 1)        i32   per-sequence lengths
    wih_ref : (E, 4*Hp)      bf16  W_ih^T, gate-padded to Hp lanes per gate
    whh_ref : (Hp, 4*Hp)     bf16  W_hh^T, gate-padded
    b_ref   : (1, 4*Hp)      f32   b_ih + b_hh, gate-padded
    out_ref : (Tc, Bb, Hp)   f32   per-step hidden outputs (zero past length)
    hn_ref, cn_ref : (Bb, Hp) f32  final states (written on last chunk only)
    xg_sc   : (Tc, Bb, 4*Hp) f32   staged input projections (bounds vreg pressure)
    h_sc, c_sc : (Bb, Hp)    f32   state carried across time chunks
    """
    chunk = pl.program_id(1)
    Tc, Bb, E = x_ref.shape
    Hp = whh_ref.shape[0]

    # ---- input projection for the whole chunk: ONE bf16 MXU matmul ----
    x_all = x_ref[...].reshape(Tc * Bb, E)                       # bf16
    xg = jnp.dot(x_all, wih_ref[...], preferred_element_type=jnp.float32)
    xg_sc[...] = (xg + b_ref[...]).reshape(Tc, Bb, 4 * Hp)       # dense store

    # ---- validity mask for every step of this chunk, hoisted out of the loop
    t_idx = chunk * Tc + jax.lax.broadcasted_iota(jnp.int32, (Bb, Tc), 1)
    valid_all = len_ref[...] > t_idx                             # (Bb, Tc) bool

    # ---- carry-in state (skip the scratch round-trip for a single chunk) ----
    if num_chunks == 1:
        h = jnp.zeros((Bb, Hp), jnp.float32)
        c = jnp.zeros((Bb, Hp), jnp.float32)
    else:
        @pl.when(chunk == 0)
        def _():
            h_sc[...] = jnp.zeros_like(h_sc)
            c_sc[...] = jnp.zeros_like(c_sc)
        h = h_sc[...]
        c = c_sc[...]

    # Statically unrolled recurrence; only one step's temporaries live in vregs
    # because xg is re-read from the VMEM scratch each step.
    for tl in range(Tc):
        gates = xg_sc[tl] + jnp.dot(h.astype(jnp.bfloat16), whh_ref[...],
                                    preferred_element_type=jnp.float32)
        # 128-lane-aligned gate slices (PyTorch order i, f, g, o).
        i_g = jax.nn.sigmoid(gates[:, 0 * Hp:1 * Hp])
        f_g = jax.nn.sigmoid(gates[:, 1 * Hp:2 * Hp])
        g_g = jnp.tanh(gates[:, 2 * Hp:3 * Hp])
        o_g = jax.nn.sigmoid(gates[:, 3 * Hp:4 * Hp])

        c_new = f_g * c + i_g * g_g
        h_new = o_g * jnp.tanh(c_new)

        valid = valid_all[:, tl:tl + 1]                          # (Bb, 1)
        h = jnp.where(valid, h_new, h)                           # freeze past length
        c = jnp.where(valid, c_new, c)
        # Dense, unmasked (Bb, Hp) = (8k, 128m) tile store (time-major layout).
        out_ref[pl.ds(tl, 1), :, :] = jnp.where(valid, h_new, 0.0)[None, :, :]

    if num_chunks > 1:
        @pl.when(chunk < num_chunks - 1)
        def _():
            h_sc[...] = h
            c_sc[...] = c

    @pl.when(chunk == num_chunks - 1)
    def _():
        hn_ref[...] = h
        cn_ref[...] = c


def _default_time_chunk(T, Bb, E, Hp, unroll_cap=64, budget=6 << 20):
    """Largest divisor of T whose streamed chunk fits `budget`, preferring >=2 chunks."""
    def fits(tc):
        streamed = (2 * tc * Bb * E * 2          # x chunk (bf16), double-buffered
                    + 2 * tc * Bb * Hp * 4       # out chunk (f32), double-buffered
                    + tc * Bb * 4 * Hp * 4)      # xg scratch (f32)
        return tc <= unroll_cap and streamed <= budget
    divs = [d for d in range(1, T + 1) if T % d == 0 and fits(d)]
    if not divs:
        return 1
    proper = [d for d in divs if d < T]
    if T > 8 and proper:
        return max(proper)    # keep >=2 chunks so the next x-chunk DMA overlaps compute
    return max(divs)


def _default_batch_block(Bp):
    """Split the (padded) batch into 2 parallel blocks once big enough (v7x megacore)."""
    if Bp >= 16 and Bp % 16 == 0:
        return Bp // 2
    return Bp


def _vmem_estimate_bytes(Tc, Bb, E, Hp):
    est = 0
    est += 2 * Tc * Bb * E * 2                       # x chunk, bf16, 2 buffers
    est += 2 * Tc * Bb * Hp * 4                      # out chunk, f32, 2 buffers
    est += 2 * (E * 4 * Hp + Hp * 4 * Hp) * 2        # weights, bf16, 2 buffers
    est += 2 * 4 * Hp * 4                            # bias
    est += Tc * Bb * 4 * Hp * 4                      # xg scratch
    est += 2 * Bb * Hp * 4                           # h/c carry
    est += 2 * 2 * Bb * Hp * 4                       # hn/cn blocks
    est += 2 * Bb * 4                                # lengths
    return est


@functools.partial(jax.jit, static_argnames=("time_chunk", "batch_block"))
def lstm_pallas(x_tbe, lengths_b1, w_ih_p, w_hh_p, bias_p, *,
                time_chunk=None, batch_block=None):
    """x_tbe: (T, Bp, E) bf16 time-major, Bp multiple of 8. Returns (out, h_n, c_n)."""
    T, Bp, E = x_tbe.shape
    Hp = w_hh_p.shape[0]

    Bb = _default_batch_block(Bp) if batch_block is None else batch_block
    assert Bp % Bb == 0 and Bb % 8 == 0
    Tc = _default_time_chunk(T, Bb, E, Hp) if time_chunk is None else time_chunk
    assert T % Tc == 0, "time_chunk must divide the sequence length"
    num_chunks = T // Tc
    num_bblocks = Bp // Bb

    out_shapes = (
        jax.ShapeDtypeStruct((T, Bp, Hp), jnp.float32),   # per-step outputs (time-major)
        jax.ShapeDtypeStruct((Bp, Hp), jnp.float32),      # h_n
        jax.ShapeDtypeStruct((Bp, Hp), jnp.float32),      # c_n
    )

    grid_spec = pltpu.PrefetchScalarGridSpec(
        num_scalar_prefetch=0,
        grid=(num_bblocks, num_chunks),
        in_specs=[
            pl.BlockSpec((Tc, Bb, E), lambda b, c: (c, b, 0)),     # x chunk (bf16)
            pl.BlockSpec((Bb, 1), lambda b, c: (b, 0)),            # lengths
            pl.BlockSpec((E, 4 * Hp), lambda b, c: (0, 0)),        # W_ih^T (bf16, padded)
            pl.BlockSpec((Hp, 4 * Hp), lambda b, c: (0, 0)),       # W_hh^T (bf16, padded)
            pl.BlockSpec((1, 4 * Hp), lambda b, c: (0, 0)),        # bias (f32, padded)
        ],
        out_specs=(
            pl.BlockSpec((Tc, Bb, Hp), lambda b, c: (c, b, 0)),
            pl.BlockSpec((Bb, Hp), lambda b, c: (b, 0)),
            pl.BlockSpec((Bb, Hp), lambda b, c: (b, 0)),
        ),
        scratch_shapes=[
            pltpu.VMEM((Tc, Bb, 4 * Hp), jnp.float32),   # staged input projections
            pltpu.VMEM((Bb, Hp), jnp.float32),           # h carry across chunks
            pltpu.VMEM((Bb, Hp), jnp.float32),           # c carry across chunks
        ],
    )

    vmem_limit = int(min(max(int(1.5 * _vmem_estimate_bytes(Tc, Bb, E, Hp)),
                             32 << 20), 64 << 20))

    kernel = functools.partial(_lstm_chunk_kernel, num_chunks=num_chunks)
    return pl.pallas_call(
        kernel,
        out_shape=out_shapes,
        grid_spec=grid_spec,
        compiler_params=pltpu.CompilerParams(
            dimension_semantics=("parallel", "arbitrary"),   # batch blocks || , time serial
            vmem_limit_bytes=vmem_limit),
    )(x_tbe, lengths_b1, w_ih_p, w_hh_p, bias_p)


def _pad_gate_dim(w, H, Hp):
    """Pad the trailing 4H gate axis to 4Hp, per gate block (PyTorch i,f,g,o)."""
    lead = w.shape[:-1]
    w = w.reshape(lead + (4, H))
    pad = [(0, 0)] * len(lead) + [(0, 0), (0, Hp - H)]
    return jnp.pad(w, pad).reshape(lead + (4 * Hp,))


class FactEncoderPallas:
    """JAX/Pallas port of FactEncoder.forward (eval mode, 1-layer unidirectional LSTM)."""

    def __init__(self, vocab_size, max_len, embedding_size, hidden_size, key):
        self.vocab_size = vocab_size
        self.max_len = max_len
        self.embedding_size = embedding_size
        self.hidden_size = hidden_size

        k_emb, k_wih, k_whh, k_bih, k_bhh = jax.random.split(key, 5)
        scale = 1.0 / jnp.sqrt(hidden_size)
        self.embedding = jax.random.normal(
            k_emb, (vocab_size, embedding_size), jnp.float32) * 0.1
        # PyTorch nn.LSTM parameter shapes: W_ih (4H, E), W_hh (4H, H), b_* (4H,)
        self.w_ih = jax.random.uniform(
            k_wih, (4 * hidden_size, embedding_size), jnp.float32, -scale, scale)
        self.w_hh = jax.random.uniform(
            k_whh, (4 * hidden_size, hidden_size), jnp.float32, -scale, scale)
        self.b_ih = jax.random.uniform(
            k_bih, (4 * hidden_size,), jnp.float32, -scale, scale)
        self.b_hh = jax.random.uniform(
            k_bhh, (4 * hidden_size,), jnp.float32, -scale, scale)

        # Kernel-side parameters: transposed, per-gate padded to Hp = ceil(H/128)*128
        # lanes, and cast to bf16 (MXU operands).  Per-gate 128-padding keeps the
        # gate slices and output stores lane-dense; it is zero-waste whenever
        # H % 128 == 0 (production sizes) and only costs extra MXU columns in the
        # tiny-H, latency-bound regime (accepted trade-off).
        H = hidden_size
        Hp = ((H + 127) // 128) * 128
        self.hidden_padded = Hp
        self.w_ih_p = _pad_gate_dim(self.w_ih.T, H, Hp).astype(jnp.bfloat16)     # (E, 4Hp)
        w_hh_p = _pad_gate_dim(self.w_hh.T, H, Hp)                               # (H, 4Hp)
        self.w_hh_p = jnp.pad(w_hh_p, ((0, Hp - H), (0, 0))).astype(jnp.bfloat16)  # (Hp, 4Hp)
        self.bias_p = _pad_gate_dim((self.b_ih + self.b_hh)[None, :], H, Hp)     # (1, 4Hp) f32
        # bf16 embedding table for the kernel's activation stream.
        self.emb_bf16 = self.embedding.astype(jnp.bfloat16)

    def __call__(self, input_var, input_lengths=None, *, time_chunk=None):
        B, T = input_var.shape
        H = self.hidden_size

        # nn.Embedding lookup (glue), produced directly in the kernel's
        # time-major layout.  input_dropout is identity in eval mode.
        # TODO(synk): fusing the gather into the kernel (scalar-prefetch token ids
        # + DMA gather from the table in pl.ANY) would remove one HBM round trip
        # of the (B,T,E) activations.
        x_tbe = jnp.take(self.emb_bf16, input_var.T, axis=0)        # (T, B, E) bf16

        if input_lengths is None:
            lengths = jnp.full((B,), T, jnp.int32)
        else:
            lengths = jnp.asarray(input_lengths, jnp.int32)

        # Pad batch to a multiple of 8 (sublane / MXU M dimension); padded rows
        # have length 0, so they stay zero end-to-end.
        Bp = max(8, ((B + 7) // 8) * 8)
        if Bp != B:
            x_tbe = jnp.pad(x_tbe, ((0, 0), (0, Bp - B), (0, 0)))
            lengths = jnp.pad(lengths, (0, Bp - B))

        out_p, h_p, c_p = lstm_pallas(
            x_tbe, lengths[:, None], self.w_ih_p, self.w_hh_p, self.bias_p,
            time_chunk=time_chunk)

        output = jnp.transpose(out_p, (1, 0, 2))[:B, :, :H]          # (B, T, H)
        hidden = (h_p[None, :B, :H], c_p[None, :B, :H])              # (1, B, H) each
        return output, hidden


def _reference_forward(enc, input_var, lengths):
    """Pure-JAX reference (lax.scan) with identical masking + bf16 matmul operands."""
    B, T = input_var.shape
    H = enc.hidden_size
    embedded = jnp.take(enc.emb_bf16, input_var, axis=0)             # (B, T, E) bf16
    mask = (jnp.arange(T)[None, :] < lengths[:, None]).astype(jnp.float32)
    w_ih_bf = enc.w_ih.astype(jnp.bfloat16)
    w_hh_bf = enc.w_hh.astype(jnp.bfloat16)
    bias = enc.b_ih + enc.b_hh

    def step(carry, xt_mt):
        h, c = carry
        x_t, m_t = xt_mt                                             # (B,E) bf16, (B,1)
        gates = (jnp.dot(x_t, w_ih_bf.T, preferred_element_type=jnp.float32)
                 + jnp.dot(h.astype(jnp.bfloat16), w_hh_bf.T,
                           preferred_element_type=jnp.float32)
                 + bias)
        i = jax.nn.sigmoid(gates[:, 0 * H:1 * H])
        f = jax.nn.sigmoid(gates[:, 1 * H:2 * H])
        g = jnp.tanh(gates[:, 2 * H:3 * H])
        o = jax.nn.sigmoid(gates[:, 3 * H:4 * H])
        c_new = f * c + i * g
        h_new = o * jnp.tanh(c_new)
        h = m_t * h_new + (1 - m_t) * h
        c = m_t * c_new + (1 - m_t) * c
        return (h, c), m_t * h_new

    x_tbe = jnp.transpose(embedded, (1, 0, 2))
    m_tb1 = jnp.transpose(mask, (1, 0))[:, :, None]
    (h_n, c_n), out_tbh = jax.lax.scan(
        step, (jnp.zeros((B, H)), jnp.zeros((B, H))), (x_tbe, m_tb1))
    return jnp.transpose(out_tbh, (1, 0, 2)), (h_n[None], c_n[None])


if __name__ == "__main__":
    key = jax.random.PRNGKey(0)
    k_params, k_tok = jax.random.split(key)

    vocab_size, max_len = 50, 8
    embedding_size, hidden_size = 32, 32
    batch, seq_len = 2, 8

    enc = FactEncoderPallas(vocab_size, max_len, embedding_size, hidden_size, k_params)

    input_var = jax.random.randint(k_tok, (batch, seq_len), 0, vocab_size, jnp.int32)
    input_lengths = jnp.array([8, 5], jnp.int32)

    # time_chunk=4 exercises the multi-chunk (carried-state) path at this tiny T.
    output, (h_n, c_n) = enc(input_var, input_lengths, time_chunk=4)
    jax.block_until_ready((output, h_n, c_n))

    # correctness check against pure-JAX reference (same bf16-operand quantization)
    ref_out, (ref_h, ref_c) = _reference_forward(enc, input_var, input_lengths)
    assert output.shape == (batch, seq_len, hidden_size)
    assert h_n.shape == (1, batch, hidden_size) and c_n.shape == (1, batch, hidden_size)
    assert jnp.allclose(output, ref_out, atol=2e-3, rtol=2e-3)
    assert jnp.allclose(h_n, ref_h, atol=2e-3, rtol=2e-3)
    assert jnp.allclose(c_n, ref_c, atol=2e-3, rtol=2e-3)

    print("KERNEL_OK")
</pallas_src>

<mosaic_0001>
module attributes {stable_mosaic.version = 11 : i64} {
  func.func @_lstm_chunk_kernel(%arg0: i32, %arg1: i32, %arg2: memref<4x8x32xbf16, #tpu.memory_space<vmem>>, %arg3: memref<8x1xi32, #tpu.memory_space<vmem>>, %arg4: memref<32x512xbf16, #tpu.memory_space<vmem>>, %arg5: memref<128x512xbf16, #tpu.memory_space<vmem>>, %arg6: memref<1x512xf32, #tpu.memory_space<vmem>>, %arg7: memref<4x8x128xf32, #tpu.memory_space<vmem>>, %arg8: memref<8x128xf32, #tpu.memory_space<vmem>>, %arg9: memref<8x128xf32, #tpu.memory_space<vmem>>, %arg10: memref<4x8x512xf32, #tpu.memory_space<vmem>>, %arg11: memref<8x128xf32, #tpu.memory_space<vmem>>, %arg12: memref<8x128xf32, #tpu.memory_space<vmem>>) attributes {dimension_semantics = [#tpu.dimension_semantics<parallel>, #tpu.dimension_semantics<arbitrary>], iteration_bounds = array<i64: 1, 2>, scalar_prefetch = 0 : i64, scratch_operands = 3 : i64, tpu.core_type = #tpu.core_type<tc>, window_params = [{transform_indices = @transform_0, window_bounds = array<i64: 4, 8, 32>}, {transform_indices = @transform_1, window_bounds = array<i64: 8, 1>}, {pipeline_mode = #tpu.pipeline_mode<synchronous>, transform_indices = @transform_2, window_bounds = array<i64: 32, 512>}, {pipeline_mode = #tpu.pipeline_mode<synchronous>, transform_indices = @transform_3, window_bounds = array<i64: 128, 512>}, {pipeline_mode = #tpu.pipeline_mode<synchronous>, transform_indices = @transform_4, window_bounds = array<i64: 1, 512>}, {transform_indices = @transform_5, window_bounds = array<i64: 4, 8, 128>}, {transform_indices = @transform_6, window_bounds = array<i64: 8, 128>}, {transform_indices = @transform_7, window_bounds = array<i64: 8, 128>}]} {
    %c0 = arith.constant 0 : index
    %c0_0 = arith.constant 0 : index
    %c0_1 = arith.constant 0 : index
    %0 = vector.load %arg2[%c0, %c0_0, %c0_1] : memref<4x8x32xbf16, #tpu.memory_space<vmem>>, vector<4x8x32xbf16>
    %1 = vector.shape_cast %0 : vector<4x8x32xbf16> to vector<32x32xbf16>
    %c0_2 = arith.constant 0 : index
    %c0_3 = arith.constant 0 : index
    %2 = vector.load %arg4[%c0_2, %c0_3] : memref<32x512xbf16, #tpu.memory_space<vmem>>, vector<32x512xbf16>
    %cst = arith.constant dense<0.000000e+00> : vector<32x512xf32>
    %3 = tpu.matmul %1, %2, %cst {dimension_numbers = #tpu.dot_dimension_numbers<[1], [0], [0], [1], [0, 0, 1, 1], [], []>} : vector<32x32xbf16>, vector<32x512xbf16>, vector<32x512xf32> -> vector<32x512xf32>
    %c0_4 = arith.constant 0 : index
    %c0_5 = arith.constant 0 : index
    %4 = vector.load %arg6[%c0_4, %c0_5] : memref<1x512xf32, #tpu.memory_space<vmem>>, vector<1x512xf32>
    %5 = vector.broadcast %4 : vector<1x512xf32> to vector<32x512xf32>
    %6 = arith.addf %3, %5 : vector<32x512xf32>
    %7 = vector.shape_cast %6 : vector<32x512xf32> to vector<4x8x512xf32>
    %c0_6 = arith.constant 0 : index
    %c0_7 = arith.constant 0 : index
    %c0_8 = arith.constant 0 : index
    %8 = vector.load %arg10[%c0_6, %c0_7, %c0_8] : memref<4x8x512xf32, #tpu.memory_space<vmem>>, vector<4x8x512xf32>
    tpu.vector_store %arg10[%c0_6, %c0_7, %c0_8], %7 {strides = array<i32>} : memref<4x8x512xf32, #tpu.memory_space<vmem>>, vector<4x8x512xf32>,
    %c4_i32 = arith.constant 4 : i32
    %9 = arith.muli %arg1, %c4_i32 : i32
    %10 = tpu.iota {dimensions = array<i32: 1>} : vector<8x4xi32>
    %11 = vector.broadcast %9 : i32 to vector<8x4xi32>
    %12 = arith.addi %11, %10 : vector<8x4xi32>
    %c0_9 = arith.constant 0 : index
    %c0_10 = arith.constant 0 : index
    %13 = vector.load %arg3[%c0_9, %c0_10] : memref<8x1xi32, #tpu.memory_space<vmem>>, vector<8x1xi32>
    %14 = vector.broadcast %13 : vector<8x1xi32> to vector<8x4xi32>
    %15 = arith.cmpi sgt, %14, %12 : vector<8x4xi32>
    %c0_i32 = arith.constant 0 : i32
    %16 = arith.cmpi eq, %arg1, %c0_i32 : i32
    %17 = arith.extui %16 : i1 to i32
    %c0_i32_11 = arith.constant 0 : i32
    %18 = arith.cmpi ne, %17, %c0_i32_11 : i32
    scf.if %18 {
      %cst_68 = arith.constant 0.000000e+00 : f32
      %203 = vector.broadcast %cst_68 : f32 to vector<8x128xf32>
      %c0_69 = arith.constant 0 : index
      %c0_70 = arith.constant 0 : index
      %204 = vector.load %arg11[%c0_69, %c0_70] : memref<8x128xf32, #tpu.memory_space<vmem>>, vector<8x128xf32>
      tpu.vector_store %arg11[%c0_69, %c0_70], %203 {strides = array<i32>} : memref<8x128xf32, #tpu.memory_space<vmem>>, vector<8x128xf32>,
      %cst_71 = arith.constant 0.000000e+00 : f32
      %205 = vector.broadcast %cst_71 : f32 to vector<8x128xf32>
      %c0_72 = arith.constant 0 : index
      %c0_73 = arith.constant 0 : index
      %206 = vector.load %arg12[%c0_72, %c0_73] : memref<8x128xf32, #tpu.memory_space<vmem>>, vector<8x128xf32>
      tpu.vector_store %arg12[%c0_72, %c0_73], %205 {strides = array<i32>} : memref<8x128xf32, #tpu.memory_space<vmem>>, vector<8x128xf32>,
    } else {
    }
    %c0_12 = arith.constant 0 : index
    %c0_13 = arith.constant 0 : index
    %19 = vector.load %arg11[%c0_12, %c0_13] : memref<8x128xf32, #tpu.memory_space<vmem>>, vector<8x128xf32>
    %c0_14 = arith.constant 0 : index
    %c0_15 = arith.constant 0 : index
    %20 = vector.load %arg12[%c0_14, %c0_15] : memref<8x128xf32, #tpu.memory_space<vmem>>, vector<8x128xf32>
    %c0_16 = arith.constant 0 : index
    %c0_17 = arith.constant 0 : index
    %c0_18 = arith.constant 0 : index
    %21 = vector.load %arg10[%c0_16, %c0_17, %c0_18] : memref<4x8x512xf32, #tpu.memory_space<vmem>>, vector<1x8x512xf32>
    %22 = vector.shape_cast %21 : vector<1x8x512xf32> to vector<8x512xf32>
    %23 = arith.truncf %19 : vector<8x128xf32> to vector<8x128xbf16>
    %c0_19 = arith.constant 0 : index
    %c0_20 = arith.constant 0 : index
    %24 = vector.load %arg5[%c0_19, %c0_20] : memref<128x512xbf16, #tpu.memory_space<vmem>>, vector<128x512xbf16>
    %cst_21 = arith.constant dense<0.000000e+00> : vector<8x512xf32>
    %25 = tpu.matmul %23, %24, %cst_21 {dimension_numbers = #tpu.dot_dimension_numbers<[1], [0], [0], [1], [0, 0, 1, 1], [], []>} : vector<8x128xbf16>, vector<128x512xbf16>, vector<8x512xf32> -> vector<8x512xf32>
    %26 = arith.addf %22, %25 : vector<8x512xf32>
    %27 = vector.extract_strided_slice %26 {offsets = [0, 0], sizes = [8, 128], strides = [1, 1]} : vector<8x512xf32> to vector<8x128xf32>
    %28 = arith.negf %27 : vector<8x128xf32>
    %29 = math.exp %28 : vector<8x128xf32>
    %cst_22 = arith.constant 1.000000e+00 : f32
    %30 = vector.broadcast %cst_22 : f32 to vector<8x128xf32>
    %31 = arith.addf %30, %29 : vector<8x128xf32>
    %32 = arith.divf %30, %31 : vector<8x128xf32>
    %33 = vector.extract_strided_slice %26 {offsets = [0, 128], sizes = [8, 128], strides = [1, 1]} : vector<8x512xf32> to vector<8x128xf32>
    %34 = arith.negf %33 : vector<8x128xf32>
    %35 = math.exp %34 : vector<8x128xf32>
    %cst_23 = arith.constant 1.000000e+00 : f32
    %36 = vector.broadcast %cst_23 : f32 to vector<8x128xf32>
    %37 = arith.addf %36, %35 : vector<8x128xf32>
    %38 = arith.divf %36, %37 : vector<8x128xf32>
    %39 = vector.extract_strided_slice %26 {offsets = [0, 256], sizes = [8, 128], strides = [1, 1]} : vector<8x512xf32> to vector<8x128xf32>
    %40 = math.tanh %39 : vector<8x128xf32>
    %41 = vector.extract_strided_slice %26 {offsets = [0, 384], sizes = [8, 128], strides = [1, 1]} : vector<8x512xf32> to vector<8x128xf32>
    %42 = arith.negf %41 : vector<8x128xf32>
    %43 = math.exp %42 : vector<8x128xf32>
    %cst_24 = arith.constant 1.000000e+00 : f32
    %44 = vector.broadcast %cst_24 : f32 to vector<8x128xf32>
    %45 = arith.addf %44, %43 : vector<8x128xf32>
    %46 = arith.divf %44, %45 : vector<8x128xf32>
    %47 = arith.mulf %38, %20 : vector<8x128xf32>
    %48 = arith.mulf %32, %40 : vector<8x128xf32>
    %49 = arith.addf %47, %48 : vector<8x128xf32>
    %50 = math.tanh %49 : vector<8x128xf32>
    %51 = arith.mulf %46, %50 : vector<8x128xf32>
    %52 = vector.extract_strided_slice %15 {offsets = [0, 0], sizes = [8, 1], strides = [1, 1]} : vector<8x4xi1> to vector<8x1xi1>
    %53 = vector.shape_cast %52 : vector<8x1xi1> to vector<8x1xi1>
    %54 = vector.broadcast %53 : vector<8x1xi1> to vector<8x128xi1>
    %55 = arith.select %54, %51, %19 : vector<8x128xi1>, vector<8x128xf32>
    %56 = vector.shape_cast %52 : vector<8x1xi1> to vector<8x1xi1>
    %57 = vector.broadcast %56 : vector<8x1xi1> to vector<8x128xi1>
    %58 = arith.select %57, %49, %20 : vector<8x128xi1>, vector<8x128xf32>
    %cst_25 = arith.constant 0.000000e+00 : f32
    %59 = vector.shape_cast %52 : vector<8x1xi1> to vector<8x1xi1>
    %60 = vector.broadcast %59 : vector<8x1xi1> to vector<8x128xi1>
    %61 = vector.broadcast %cst_25 : f32 to vector<8x128xf32>
    %62 = arith.select %60, %51, %61 : vector<8x128xi1>, vector<8x128xf32>
    %63 = vector.shape_cast %62 : vector<8x128xf32> to vector<1x8x128xf32>
    %c0_26 = arith.constant 0 : index
    %c0_27 = arith.constant 0 : index
    %c0_28 = arith.constant 0 : index
    %64 = vector.load %arg7[%c0_26, %c0_27, %c0_28] : memref<4x8x128xf32, #tpu.memory_space<vmem>>, vector<1x8x128xf32>
    tpu.vector_store %arg7[%c0_26, %c0_27, %c0_28], %63 {strides = array<i32>} : memref<4x8x128xf32, #tpu.memory_space<vmem>>, vector<1x8x128xf32>,
    %c1 = arith.constant 1 : index
    %c0_29 = arith.constant 0 : index
    %c0_30 = arith.constant 0 : index
    %65 = vector.load %arg10[%c1, %c0_29, %c0_30] : memref<4x8x512xf32, #tpu.memory_space<vmem>>, vector<1x8x512xf32>
    %66 = vector.shape_cast %65 : vector<1x8x512xf32> to vector<8x512xf32>
    %67 = arith.truncf %55 : vector<8x128xf32> to vector<8x128xbf16>
    %c0_31 = arith.constant 0 : index
    %c0_32 = arith.constant 0 : index
    %68 = vector.load %arg5[%c0_31, %c0_32] : memref<128x512xbf16, #tpu.memory_space<vmem>>, vector<128x512xbf16>
    %cst_33 = arith.constant dense<0.000000e+00> : vector<8x512xf32>
    %69 = tpu.matmul %67, %68, %cst_33 {dimension_numbers = #tpu.dot_dimension_numbers<[1], [0], [0], [1], [0, 0, 1, 1], [], []>} : vector<8x128xbf16>, vector<128x512xbf16>, vector<8x512xf32> -> vector<8x512xf32>
    %70 = arith.addf %66, %69 : vector<8x512xf32>
    %71 = vector.extract_strided_slice %70 {offsets = [0, 0], sizes = [8, 128], strides = [1, 1]} : vector<8x512xf32> to vector<8x128xf32>
    %72 = arith.negf %71 : vector<8x128xf32>
    %73 = math.exp %72 : vector<8x128xf32>
    %cst_34 = arith.constant 1.000000e+00 : f32
    %74 = vector.broadcast %cst_34 : f32 to vector<8x128xf32>
    %75 = arith.addf %74, %73 : vector<8x128xf32>
    %76 = arith.divf %74, %75 : vector<8x128xf32>
    %77 = vector.extract_strided_slice %70 {offsets = [0, 128], sizes = [8, 128], strides = [1, 1]} : vector<8x512xf32> to vector<8x128xf32>
    %78 = arith.negf %77 : vector<8x128xf32>
    %79 = math.exp %78 : vector<8x128xf32>
    %cst_35 = arith.constant 1.000000e+00 : f32
    %80 = vector.broadcast %cst_35 : f32 to vector<8x128xf32>
    %81 = arith.addf %80, %79 : vector<8x128xf32>
    %82 = arith.divf %80, %81 : vector<8x128xf32>
    %83 = vector.extract_strided_slice %70 {offsets = [0, 256], sizes = [8, 128], strides = [1, 1]} : vector<8x512xf32> to vector<8x128xf32>
    %84 = math.tanh %83 : vector<8x128xf32>
    %85 = vector.extract_strided_slice %70 {offsets = [0, 384], sizes = [8, 128], strides = [1, 1]} : vector<8x512xf32> to vector<8x128xf32>
    %86 = arith.negf %85 : vector<8x128xf32>
    %87 = math.exp %86 : vector<8x128xf32>
    %cst_36 = arith.constant 1.000000e+00 : f32
    %88 = vector.broadcast %cst_36 : f32 to vector<8x128xf32>
    %89 = arith.addf %88, %87 : vector<8x128xf32>
    %90 = arith.divf %88, %89 : vector<8x128xf32>
    %91 = arith.mulf %82, %58 : vector<8x128xf32>
    %92 = arith.mulf %76, %84 : vector<8x128xf32>
    %93 = arith.addf %91, %92 : vector<8x128xf32>
    %94 = math.tanh %93 : vector<8x128xf32>
    %95 = arith.mulf %90, %94 : vector<8x128xf32>
    %96 = vector.extract_strided_slice %15 {offsets = [0, 1], sizes = [8, 1], strides = [1, 1]} : vector<8x4xi1> to vector<8x1xi1>
    %97 = vector.shape_cast %96 : vector<8x1xi1> to vector<8x1xi1>
    %98 = vector.broadcast %97 : vector<8x1xi1> to vector<8x128xi1>
    %99 = arith.select %98, %95, %55 : vector<8x128xi1>, vector<8x128xf32>
    %100 = vector.shape_cast %96 : vector<8x1xi1> to vector<8x1xi1>
    %101 = vector.broadcast %100 : vector<8x1xi1> to vector<8x128xi1>
    %102 = arith.select %101, %93, %58 : vector<8x128xi1>, vector<8x128xf32>
    %cst_37 = arith.constant 0.000000e+00 : f32
    %103 = vector.shape_cast %96 : vector<8x1xi1> to vector<8x1xi1>
    %104 = vector.broadcast %103 : vector<8x1xi1> to vector<8x128xi1>
    %105 = vector.broadcast %cst_37 : f32 to vector<8x128xf32>
    %106 = arith.select %104, %95, %105 : vector<8x128xi1>, vector<8x128xf32>
    %107 = vector.shape_cast %106 : vector<8x128xf32> to vector<1x8x128xf32>
    %c1_38 = arith.constant 1 : index
    %c0_39 = arith.constant 0 : index
    %c0_40 = arith.constant 0 : index
    %108 = vector.load %arg7[%c1_38, %c0_39, %c0_40] : memref<4x8x128xf32, #tpu.memory_space<vmem>>, vector<1x8x128xf32>
    tpu.vector_store %arg7[%c1_38, %c0_39, %c0_40], %107 {strides = array<i32>} : memref<4x8x128xf32, #tpu.memory_space<vmem>>, vector<1x8x128xf32>,
    %c2 = arith.constant 2 : index
    %c0_41 = arith.constant 0 : index
    %c0_42 = arith.constant 0 : index
    %109 = vector.load %arg10[%c2, %c0_41, %c0_42] : memref<4x8x512xf32, #tpu.memory_space<vmem>>, vector<1x8x512xf32>
    %110 = vector.shape_cast %109 : vector<1x8x512xf32> to vector<8x512xf32>
    %111 = arith.truncf %99 : vector<8x128xf32> to vector<8x128xbf16>
    %c0_43 = arith.constant 0 : index
    %c0_44 = arith.constant 0 : index
    %112 = vector.load %arg5[%c0_43, %c0_44] : memref<128x512xbf16, #tpu.memory_space<vmem>>, vector<128x512xbf16>
    %cst_45 = arith.constant dense<0.000000e+00> : vector<8x512xf32>
    %113 = tpu.matmul %111, %112, %cst_45 {dimension_numbers = #tpu.dot_dimension_numbers<[1], [0], [0], [1], [0, 0, 1, 1], [], []>} : vector<8x128xbf16>, vector<128x512xbf16>, vector<8x512xf32> -> vector<8x512xf32>
    %114 = arith.addf %110, %113 : vector<8x512xf32>
    %115 = vector.extract_strided_slice %114 {offsets = [0, 0], sizes = [8, 128], strides = [1, 1]} : vector<8x512xf32> to vector<8x128xf32>
    %116 = arith.negf %115 : vector<8x128xf32>
    %117 = math.exp %116 : vector<8x128xf32>
    %cst_46 = arith.constant 1.000000e+00 : f32
    %118 = vector.broadcast %cst_46 : f32 to vector<8x128xf32>
    %119 = arith.addf %118, %117 : vector<8x128xf32>
    %120 = arith.divf %118, %119 : vector<8x128xf32>
    %121 = vector.extract_strided_slice %114 {offsets = [0, 128], sizes = [8, 128], strides = [1, 1]} : vector<8x512xf32> to vector<8x128xf32>
    %122 = arith.negf %121 : vector<8x128xf32>
    %123 = math.exp %122 : vector<8x128xf32>
    %cst_47 = arith.constant 1.000000e+00 : f32
    %124 = vector.broadcast %cst_47 : f32 to vector<8x128xf32>
    %125 = arith.addf %124, %123 : vector<8x128xf32>
    %126 = arith.divf %124, %125 : vector<8x128xf32>
    %127 = vector.extract_strided_slice %114 {offsets = [0, 256], sizes = [8, 128], strides = [1, 1]} : vector<8x512xf32> to vector<8x128xf32>
    %128 = math.tanh %127 : vector<8x128xf32>
    %129 = vector.extract_strided_slice %114 {offsets = [0, 384], sizes = [8, 128], strides = [1, 1]} : vector<8x512xf32> to vector<8x128xf32>
    %130 = arith.negf %129 : vector<8x128xf32>
    %131 = math.exp %130 : vector<8x128xf32>
    %cst_48 = arith.constant 1.000000e+00 : f32
    %132 = vector.broadcast %cst_48 : f32 to vector<8x128xf32>
    %133 = arith.addf %132, %131 : vector<8x128xf32>
    %134 = arith.divf %132, %133 : vector<8x128xf32>
    %135 = arith.mulf %126, %102 : vector<8x128xf32>
    %136 = arith.mulf %120, %128 : vector<8x128xf32>
    %137 = arith.addf %135, %136 : vector<8x128xf32>
    %138 = math.tanh %137 : vector<8x128xf32>
    %139 = arith.mulf %134, %138 : vector<8x128xf32>
    %140 = vector.extract_strided_slice %15 {offsets = [0, 2], sizes = [8, 1], strides = [1, 1]} : vector<8x4xi1> to vector<8x1xi1>
    %141 = vector.shape_cast %140 : vector<8x1xi1> to vector<8x1xi1>
    %142 = vector.broadcast %141 : vector<8x1xi1> to vector<8x128xi1>
    %143 = arith.select %142, %139, %99 : vector<8x128xi1>, vector<8x128xf32>
    %144 = vector.shape_cast %140 : vector<8x1xi1> to vector<8x1xi1>
    %145 = vector.broadcast %144 : vector<8x1xi1> to vector<8x128xi1>
    %146 = arith.select %145, %137, %102 : vector<8x128xi1>, vector<8x128xf32>
    %cst_49 = arith.constant 0.000000e+00 : f32
    %147 = vector.shape_cast %140 : vector<8x1xi1> to vector<8x1xi1>
    %148 = vector.broadcast %147 : vector<8x1xi1> to vector<8x128xi1>
    %149 = vector.broadcast %cst_49 : f32 to vector<8x128xf32>
    %150 = arith.select %148, %139, %149 : vector<8x128xi1>, vector<8x128xf32>
    %151 = vector.shape_cast %150 : vector<8x128xf32> to vector<1x8x128xf32>
    %c2_50 = arith.constant 2 : index
    %c0_51 = arith.constant 0 : index
    %c0_52 = arith.constant 0 : index
    %152 = vector.load %arg7[%c2_50, %c0_51, %c0_52] : memref<4x8x128xf32, #tpu.memory_space<vmem>>, vector<1x8x128xf32>
    tpu.vector_store %arg7[%c2_50, %c0_51, %c0_52], %151 {strides = array<i32>} : memref<4x8x128xf32, #tpu.memory_space<vmem>>, vector<1x8x128xf32>,
    %c3 = arith.constant 3 : index
    %c0_53 = arith.constant 0 : index
    %c0_54 = arith.constant 0 : index
    %153 = vector.load %arg10[%c3, %c0_53, %c0_54] : memref<4x8x512xf32, #tpu.memory_space<vmem>>, vector<1x8x512xf32>
    %154 = vector.shape_cast %153 : vector<1x8x512xf32> to vector<8x512xf32>
    %155 = arith.truncf %143 : vector<8x128xf32> to vector<8x128xbf16>
    %c0_55 = arith.constant 0 : index
    %c0_56 = arith.constant 0 : index
    %156 = vector.load %arg5[%c0_55, %c0_56] : memref<128x512xbf16, #tpu.memory_space<vmem>>, vector<128x512xbf16>
    %cst_57 = arith.constant dense<0.000000e+00> : vector<8x512xf32>
    %157 = tpu.matmul %155, %156, %cst_57 {dimension_numbers = #tpu.dot_dimension_numbers<[1], [0], [0], [1], [0, 0, 1, 1], [], []>} : vector<8x128xbf16>, vector<128x512xbf16>, vector<8x512xf32> -> vector<8x512xf32>
    %158 = arith.addf %154, %157 : vector<8x512xf32>
    %159 = vector.extract_strided_slice %158 {offsets = [0, 0], sizes = [8, 128], strides = [1, 1]} : vector<8x512xf32> to vector<8x128xf32>
    %160 = arith.negf %159 : vector<8x128xf32>
    %161 = math.exp %160 : vector<8x128xf32>
    %cst_58 = arith.constant 1.000000e+00 : f32
    %162 = vector.broadcast %cst_58 : f32 to vector<8x128xf32>
    %163 = arith.addf %162, %161 : vector<8x128xf32>
    %164 = arith.divf %162, %163 : vector<8x128xf32>
    %165 = vector.extract_strided_slice %158 {offsets = [0, 128], sizes = [8, 128], strides = [1, 1]} : vector<8x512xf32> to vector<8x128xf32>
    %166 = arith.negf %165 : vector<8x128xf32>
    %167 = math.exp %166 : vector<8x128xf32>
    %cst_59 = arith.constant 1.000000e+00 : f32
    %168 = vector.broadcast %cst_59 : f32 to vector<8x128xf32>
    %169 = arith.addf %168, %167 : vector<8x128xf32>
    %170 = arith.divf %168, %169 : vector<8x128xf32>
    %171 = vector.extract_strided_slice %158 {offsets = [0, 256], sizes = [8, 128], strides = [1, 1]} : vector<8x512xf32> to vector<8x128xf32>
    %172 = math.tanh %171 : vector<8x128xf32>
    %173 = vector.extract_strided_slice %158 {offsets = [0, 384], sizes = [8, 128], strides = [1, 1]} : vector<8x512xf32> to vector<8x128xf32>
    %174 = arith.negf %173 : vector<8x128xf32>
    %175 = math.exp %174 : vector<8x128xf32>
    %cst_60 = arith.constant 1.000000e+00 : f32
    %176 = vector.broadcast %cst_60 : f32 to vector<8x128xf32>
    %177 = arith.addf %176, %175 : vector<8x128xf32>
    %178 = arith.divf %176, %177 : vector<8x128xf32>
    %179 = arith.mulf %170, %146 : vector<8x128xf32>
    %180 = arith.mulf %164, %172 : vector<8x128xf32>
    %181 = arith.addf %179, %180 : vector<8x128xf32>
    %182 = math.tanh %181 : vector<8x128xf32>
    %183 = arith.mulf %178, %182 : vector<8x128xf32>
    %184 = vector.extract_strided_slice %15 {offsets = [0, 3], sizes = [8, 1], strides = [1, 1]} : vector<8x4xi1> to vector<8x1xi1>
    %185 = vector.shape_cast %184 : vector<8x1xi1> to vector<8x1xi1>
    %186 = vector.broadcast %185 : vector<8x1xi1> to vector<8x128xi1>
    %187 = arith.select %186, %183, %143 : vector<8x128xi1>, vector<8x128xf32>
    %188 = vector.shape_cast %184 : vector<8x1xi1> to vector<8x1xi1>
    %189 = vector.broadcast %188 : vector<8x1xi1> to vector<8x128xi1>
    %190 = arith.select %189, %181, %146 : vector<8x128xi1>, vector<8x128xf32>
    %cst_61 = arith.constant 0.000000e+00 : f32
    %191 = vector.shape_cast %184 : vector<8x1xi1> to vector<8x1xi1>
    %192 = vector.broadcast %191 : vector<8x1xi1> to vector<8x128xi1>
    %193 = vector.broadcast %cst_61 : f32 to vector<8x128xf32>
    %194 = arith.select %192, %183, %193 : vector<8x128xi1>, vector<8x128xf32>
    %195 = vector.shape_cast %194 : vector<8x128xf32> to vector<1x8x128xf32>
    %c3_62 = arith.constant 3 : index
    %c0_63 = arith.constant 0 : index
    %c0_64 = arith.constant 0 : index
    %196 = vector.load %arg7[%c3_62, %c0_63, %c0_64] : memref<4x8x128xf32, #tpu.memory_space<vmem>>, vector<1x8x128xf32>
    tpu.vector_store %arg7[%c3_62, %c0_63, %c0_64], %195 {strides = array<i32>} : memref<4x8x128xf32, #tpu.memory_space<vmem>>, vector<1x8x128xf32>,
    %c1_i32 = arith.constant 1 : i32
    %197 = arith.cmpi slt, %arg1, %c1_i32 : i32
    %198 = arith.extui %197 : i1 to i32
    %c0_i32_65 = arith.constant 0 : i32
    %199 = arith.cmpi ne, %198, %c0_i32_65 : i32
    scf.if %199 {
      %c0_68 = arith.constant 0 : index
      %c0_69 = arith.constant 0 : index
      %203 = vector.load %arg11[%c0_68, %c0_69] : memref<8x128xf32, #tpu.memory_space<vmem>>, vector<8x128xf32>
      tpu.vector_store %arg11[%c0_68, %c0_69], %187 {strides = array<i32>} : memref<8x128xf32, #tpu.memory_space<vmem>>, vector<8x128xf32>,
      %c0_70 = arith.constant 0 : index
      %c0_71 = arith.constant 0 : index
      %204 = vector.load %arg12[%c0_70, %c0_71] : memref<8x128xf32, #tpu.memory_space<vmem>>, vector<8x128xf32>
      tpu.vector_store %arg12[%c0_70, %c0_71], %190 {strides = array<i32>} : memref<8x128xf32, #tpu.memory_space<vmem>>, vector<8x128xf32>,
    } else {
    }
    %c1_i32_66 = arith.constant 1 : i32
    %200 = arith.cmpi eq, %arg1, %c1_i32_66 : i32
    %201 = arith.extui %200 : i1 to i32
    %c0_i32_67 = arith.constant 0 : i32
    %202 = arith.cmpi ne, %201, %c0_i32_67 : i32
    scf.if %202 {
      %c0_68 = arith.constant 0 : index
      %c0_69 = arith.constant 0 : index
      %203 = vector.load %arg8[%c0_68, %c0_69] : memref<8x128xf32, #tpu.memory_space<vmem>>, vector<8x128xf32>
      tpu.vector_store %arg8[%c0_68, %c0_69], %187 {strides = array<i32>} : memref<8x128xf32, #tpu.memory_space<vmem>>, vector<8x128xf32>,
      %c0_70 = arith.constant 0 : index
      %c0_71 = arith.constant 0 : index
      %204 = vector.load %arg9[%c0_70, %c0_71] : memref<8x128xf32, #tpu.memory_space<vmem>>, vector<8x128xf32>
      tpu.vector_store %arg9[%c0_70, %c0_71], %190 {strides = array<i32>} : memref<8x128xf32, #tpu.memory_space<vmem>>, vector<8x128xf32>,
    } else {
    }
    return
  }
  func.func @transform_0(%arg0: i32, %arg1: i32) -> (i32, i32, i32) {
    %c0_i32 = arith.constant 0 : i32
    %c0_i32_0 = arith.constant 0 : i32
    return %arg1, %arg0, %c0_i32 : i32, i32, i32
  }
  func.func @transform_1(%arg0: i32, %arg1: i32) -> (i32, i32) {
    %c0_i32 = arith.constant 0 : i32
    %c0_i32_0 = arith.constant 0 : i32
    return %arg0, %c0_i32 : i32, i32
  }
  func.func @transform_2(%arg0: i32, %arg1: i32) -> (i32, i32) {
    %c0_i32 = arith.constant 0 : i32
    %c0_i32_0 = arith.constant 0 : i32
    %c0_i32_1 = arith.constant 0 : i32
    return %c0_i32, %c0_i32_0 : i32, i32
  }
  func.func @transform_3(%arg0: i32, %arg1: i32) -> (i32, i32) {
    %c0_i32 = arith.constant 0 : i32
    %c0_i32_0 = arith.constant 0 : i32
    %c0_i32_1 = arith.constant 0 : i32
    return %c0_i32, %c0_i32_0 : i32, i32
  }
  func.func @transform_4(%arg0: i32, %arg1: i32) -> (i32, i32) {
    %c0_i32 = arith.constant 0 : i32
    %c0_i32_0 = arith.constant 0 : i32
    %c0_i32_1 = arith.constant 0 : i32
    return %c0_i32, %c0_i32_0 : i32, i32
  }
  func.func @transform_5(%arg0: i32, %arg1: i32) -> (i32, i32, i32) {
    %c0_i32 = arith.constant 0 : i32
    %c0_i32_0 = arith.constant 0 : i32
    return %arg1, %arg0, %c0_i32 : i32, i32, i32
  }
  func.func @transform_6(%arg0: i32, %arg1: i32) -> (i32, i32) {
    %c0_i32 = arith.constant 0 : i32
    %c0_i32_0 = arith.constant 0 : i32
    return %arg0, %c0_i32 : i32, i32
  }
  func.func @transform_7(%arg0: i32, %arg1: i32) -> (i32, i32) {
    %c0_i32 = arith.constant 0 : i32
    %c0_i32_0 = arith.constant 0 : i32
    return %arg0, %c0_i32 : i32, i32
  }
}

</mosaic_0001>

<llo_original>
// kernel: lstm_pallas.1
$region0: #{lstm_pallas.1}
  #allocation0 [shape = 'u32[]', space=smem, size = 0x4, offset = 0x4, fixed_abs, tag = 'smem constant byte address 0x4 - core index']
  #allocation1 [shape = 'u32[72,128]{1,0:T(1,128)}', space=vmem, size = 0x9000, scoped, tag = 'internal scratch']
  #allocation2 [shape = 'f32[4,8,512]{2,1,0:T(8,128)}', space=vmem, size = 0x10000, scoped, tag = 'scratch operand']
  #allocation3 [shape = 'f32[8,128]{1,0:T(8,128)}', space=vmem, size = 0x1000, scoped, tag = 'scratch operand']
  #allocation4 [shape = 'f32[8,128]{1,0:T(8,128)}', space=vmem, size = 0x1000, scoped, tag = 'scratch operand']
  %s0 = inlined_call_operand.hbm [shape: bf16[8,8,32], index: 0, kind: input, shape index: {}]
  %s1 = inlined_call_operand.vmem [shape: s32[8,1], index: 1, kind: input, shape index: {}]
  %s2 = inlined_call_operand.hbm [shape: bf16[32,512], index: 2, kind: input, shape index: {}]
  %s3 = inlined_call_operand.hbm [shape: bf16[128,512], index: 3, kind: input, shape index: {}]
  %s4 = inlined_call_operand.vmem [shape: f32[1,512], index: 4, kind: input, shape index: {}]
  %s5 = inlined_call_operand.hbm [shape: f32[8,8,128], index: 5, kind: output, shape index: {0}]
  %s6 = inlined_call_operand.hbm [shape: f32[8,128], index: 6, kind: output, shape index: {1}]
  %s7 = inlined_call_operand.hbm [shape: f32[8,128], index: 7, kind: output, shape index: {2}]
  %8 = xla_tuple %s5, %s6, %s7
  %s9 = sld [smem:[#allocation0]]
  $region93: #{lstm_pallas.1} parent=0
    _
  %s11 = ssub.s32 1, %s9
  %s12 = scalar_select 0, %s11, %s9
  $region1: #{lstm_pallas.1} parent=0
    #allocation5 [shape = 'u8[16384]{0}', space=vmem, size = 0x4000, scoped, tag = 'input window, operand 0']
    #allocation6 [shape = 's32[2]{0}', space=sflag, size = 0x8, scoped, tag = 'scoped memory for lstm_pallas.1']
    #allocation7 [shape = 's32[2]{0}', space=sflag, size = 0x8, scoped, tag = 'scoped memory for lstm_pallas.1']
    #allocation8 [shape = 'u8[32768]{0}', space=vmem, size = 0x8000, scoped, tag = 'input window, operand 2, single buffered']
    #allocation9 [shape = 's32[1]{0}', space=sflag, size = 0x4, scoped, tag = 'scoped memory for lstm_pallas.1']
    #allocation10 [shape = 'u8[131072]{0}', space=vmem, size = 0x20000, scoped, tag = 'input window, operand 3, single buffered']
    #allocation11 [shape = 'u8[32768]{0}', space=vmem, size = 0x8000, scoped, tag = 'output window, operand 0']
    #allocation12 [shape = 'u8[4096]{0}', space=vmem, size = 0x1000, scoped, tag = 'output window, operand 1, single buffered']
    #allocation13 [shape = 's32[1]{0}', space=sflag, size = 0x4, scoped, tag = 'scoped memory for lstm_pallas.1']
    #allocation14 [shape = 'u8[4096]{0}', space=vmem, size = 0x1000, scoped, tag = 'output window, operand 2, single buffered']
    %13 = vsyncpa [#allocation6], 0
    %s14 = scalar_lea.sflag [#allocation6], 1
    %15 = vsyncpa %s14, 0
    %16 = vsyncpa [#allocation9], 0
    %17 = vsyncpa [#allocation7], 0
    %s18 = scalar_lea.sflag [#allocation7], 1
    %19 = vsyncpa %s18, 0
    %20 = vsyncpa [#allocation13], 0
    loop: start=0, step=1, limit=4
    $region2: #{lstm_pallas.1} parent=1 // loop_pre_header
      _
    $region3: #{lstm_pallas.1} parent=1 // loop_header
      %s22 = sphi 0, %s26
      %p23 = scmp.ge.s32.totalorder %s22, 4
      %s29 = sphi 0, %s41
      %s30 = sphi 0, %s37
      %s31 = sphi 0, %s29
      %s32 = sphi 0, %s30
      %s33 = sphi 0, %s31
      %s34 = sphi 0, %s32
      %s46 = sphi 0, %s48
      %s49 = sphi 0, %s46
      %s50 = sphi 0, %s49
      %s66 = sphi 0, %s50
      %s72 = sphi 0, %s74
      %s75 = sphi 0, %s72
      %s76 = sphi 0, %s75
      %s92 = sphi 0, %s76
      %s96 = sphi 0, %s96
      %s98 = sphi 0, %s96
      %s99 = sphi 0, %s98
      %s113 = sphi 0, %s99
      %s117 = sphi 0, %s117
      %s119 = sphi 0, %s117
      %s120 = sphi 0, %s119
      %s134 = sphi 0, %s120
      %s138 = sphi 0, %s138
      %s140 = sphi 0, %s138
      %s141 = sphi 0, %s140
      %s155 = sphi 0, %s141
      %s163 = sphi 0, %s165
      %s166 = sphi 0, %s163
      %s167 = sphi 0, %s166
      %s183 = sphi 0, %s167
      %s189 = sphi 0, %s191
      %s192 = sphi 0, %s189
      %s193 = sphi 0, %s192
      %s209 = sphi 0, %s193
      %s215 = sphi 0, %s217
      %s218 = sphi 0, %s215
      %s219 = sphi 0, %s218
      %s235 = sphi 0, %s219
    $region4: #{lstm_pallas.1} parent=1 // loop_header_branch
      %25 = sbr.rel (%p23) target = $region8
    $region5: #{lstm_pallas.1} parent=1 // loop_body
      %s27 = ssub.s32 %s22, 1
      %s28 = ssub.s32 %s22, 2
      %s35 = sadd.s32 1, %s30
      %p36 = scmp.ge.s32.totalorder %s35, 2
      %s37 = scalar_select %p36, 0, %s35
      %s38 = sadd.s32 1, %s29
      %s39 = scalar_select %p36, %s38, %s29
      %p40 = scmp.ge.s32.totalorder %s39, 1
      %s41 = scalar_select %p40, 0, %s39
      %s42 = ssub.s32 %s30, %s37
      %s43 = ssub.s32 %s29, %s41
      %s44 = sor.u32 %s42, %s43
      %p45 = scmp.eq.s32.totalorder %s44, 0
      %s47 = sadd.s32 %s46, 1
      %s48 = scalar_select %p45, %s46, %s47
      %p51 = pneg %p45
      %p52 = scmp.eq.s32.totalorder %s22, 1
      %p53 = por %p51, %p52
      %p54 = scmp.ne.s32.totalorder %s46, %s49
      %p55 = scmp.eq.s32.totalorder %s22, 0
      %p56 = por %p54, %p55
      %p57 = scmp.ne.s32.totalorder %s46, %s49
      %p58 = scmp.eq.s32.totalorder %s27, 1
      %p59 = por %p57, %p58
      %p60 = scmp.ne.s32.totalorder %s49, %s50
      %p61 = scmp.eq.s32.totalorder %s27, 0
      %p62 = por %p60, %p61
      %p63 = scmp.ne.s32.totalorder %s49, %s50
      %p64 = scmp.eq.s32.totalorder %s28, 1
      %p65 = por %p63, %p64
      %p67 = scmp.ne.s32.totalorder %s50, %s66
      %p68 = scmp.eq.s32.totalorder %s28, 0
      %p69 = por %p67, %p68
      %s70 = ssub.s32 %s29, %s41
      %p71 = scmp.eq.s32.totalorder %s70, 0
      %s73 = sadd.s32 %s72, 1
      %s74 = scalar_select %p71, %s72, %s73
      %p77 = pneg %p71
      %p78 = scmp.eq.s32.totalorder %s22, 1
      %p79 = por %p77, %p78
      %p80 = scmp.ne.s32.totalorder %s72, %s75
      %p81 = scmp.eq.s32.totalorder %s22, 0
      %p82 = por %p80, %p81
      %p83 = scmp.ne.s32.totalorder %s72, %s75
      %p84 = scmp.eq.s32.totalorder %s27, 1
      %p85 = por %p83, %p84
      %p86 = scmp.ne.s32.totalorder %s75, %s76
      %p87 = scmp.eq.s32.totalorder %s27, 0
      %p88 = por %p86, %p87
      %p89 = scmp.ne.s32.totalorder %s75, %s76
      %p90 = scmp.eq.s32.totalorder %s28, 1
      %p91 = por %p89, %p90
      %p93 = scmp.ne.s32.totalorder %s76, %s92
      %p94 = scmp.eq.s32.totalorder %s28, 0
      %p95 = por %p93, %p94
      %s97 = sadd.s32 %s96, 1
      %p100 = scmp.eq.s32.totalorder %s22, 1
      %p101 = scmp.ne.s32.totalorder %s96, %s98
      %p102 = scmp.eq.s32.totalorder %s22, 0
      %p103 = por %p101, %p102
      %p104 = scmp.ne.s32.totalorder %s96, %s98
      %p105 = scmp.eq.s32.totalorder %s27, 1
      %p106 = por %p104, %p105
      %p107 = scmp.ne.s32.totalorder %s98, %s99
      %p108 = scmp.eq.s32.totalorder %s27, 0
      %p109 = por %p107, %p108
      %p110 = scmp.ne.s32.totalorder %s98, %s99
      %p111 = scmp.eq.s32.totalorder %s28, 1
      %p112 = por %p110, %p111
      %p114 = scmp.ne.s32.totalorder %s99, %s113
      %p115 = scmp.eq.s32.totalorder %s28, 0
      %p116 = por %p114, %p115
      %s118 = sadd.s32 %s117, 1
      %p121 = scmp.eq.s32.totalorder %s22, 1
      %p122 = scmp.ne.s32.totalorder %s117, %s119
      %p123 = scmp.eq.s32.totalorder %s22, 0
      %p124 = por %p122, %p123
      %p125 = scmp.ne.s32.totalorder %s117, %s119
      %p126 = scmp.eq.s32.totalorder %s27, 1
      %p127 = por %p125, %p126
      %p128 = scmp.ne.s32.totalorder %s119, %s120
      %p129 = scmp.eq.s32.totalorder %s27, 0
      %p130 = por %p128, %p129
      %p131 = scmp.ne.s32.totalorder %s119, %s120
      %p132 = scmp.eq.s32.totalorder %s28, 1
      %p133 = por %p131, %p132
      %p135 = scmp.ne.s32.totalorder %s120, %s134
      %p136 = scmp.eq.s32.totalorder %s28, 0
      %p137 = por %p135, %p136
      %s139 = sadd.s32 %s138, 1
      %p142 = scmp.eq.s32.totalorder %s22, 1
      %p143 = scmp.ne.s32.totalorder %s138, %s140
      %p144 = scmp.eq.s32.totalorder %s22, 0
      %p145 = por %p143, %p144
      %p146 = scmp.ne.s32.totalorder %s138, %s140
      %p147 = scmp.eq.s32.totalorder %s27, 1
      %p148 = por %p146, %p147
      %p149 = scmp.ne.s32.totalorder %s140, %s141
      %p150 = scmp.eq.s32.totalorder %s27, 0
      %p151 = por %p149, %p150
      %p152 = scmp.ne.s32.totalorder %s140, %s141
      %p153 = scmp.eq.s32.totalorder %s28, 1
      %p154 = por %p152, %p153
      %p156 = scmp.ne.s32.totalorder %s141, %s155
      %p157 = scmp.eq.s32.totalorder %s28, 0
      %p158 = por %p156, %p157
      %s159 = ssub.s32 %s30, %s37
      %s160 = ssub.s32 %s29, %s41
      %s161 = sor.u32 %s159, %s160
      %p162 = scmp.eq.s32.totalorder %s161, 0
      %s164 = sadd.s32 %s163, 1
      %s165 = scalar_select %p162, %s163, %s164
      %p168 = pneg %p162
      %p169 = scmp.eq.s32.totalorder %s22, 1
      %p170 = por %p168, %p169
      %p171 = scmp.ne.s32.totalorder %s163, %s166
      %p172 = scmp.eq.s32.totalorder %s22, 0
      %p173 = por %p171, %p172
      %p174 = scmp.ne.s32.totalorder %s163, %s166
      %p175 = scmp.eq.s32.totalorder %s27, 1
      %p176 = por %p174, %p175
      %p177 = scmp.ne.s32.totalorder %s166, %s167
      %p178 = scmp.eq.s32.totalorder %s27, 0
      %p179 = por %p177, %p178
      %p180 = scmp.ne.s32.totalorder %s166, %s167
      %p181 = scmp.eq.s32.totalorder %s28, 1
      %p182 = por %p180, %p181
      %p184 = scmp.ne.s32.totalorder %s167, %s183
      %p185 = scmp.eq.s32.totalorder %s28, 0
      %p186 = por %p184, %p185
      %s187 = ssub.s32 %s29, %s41
      %p188 = scmp.eq.s32.totalorder %s187, 0
      %s190 = sadd.s32 %s189, 1
      %s191 = scalar_select %p188, %s189, %s190
      %p194 = pneg %p188
      %p195 = scmp.eq.s32.totalorder %s22, 1
      %p196 = por %p194, %p195
      %p197 = scmp.ne.s32.totalorder %s189, %s192
      %p198 = scmp.eq.s32.totalorder %s22, 0
      %p199 = por %p197, %p198
      %p200 = scmp.ne.s32.totalorder %s189, %s192
      %p201 = scmp.eq.s32.totalorder %s27, 1
      %p202 = por %p200, %p201
      %p203 = scmp.ne.s32.totalorder %s192, %s193
      %p204 = scmp.eq.s32.totalorder %s27, 0
      %p205 = por %p203, %p204
      %p206 = scmp.ne.s32.totalorder %s192, %s193
      %p207 = scmp.eq.s32.totalorder %s28, 1
      %p208 = por %p206, %p207
      %p210 = scmp.ne.s32.totalorder %s193, %s209
      %p211 = scmp.eq.s32.totalorder %s28, 0
      %p212 = por %p210, %p211
      %s213 = ssub.s32 %s29, %s41
      %p214 = scmp.eq.s32.totalorder %s213, 0
      %s216 = sadd.s32 %s215, 1
      %s217 = scalar_select %p214, %s215, %s216
      %p220 = pneg %p214
      %p221 = scmp.eq.s32.totalorder %s22, 1
      %p222 = por %p220, %p221
      %p223 = scmp.ne.s32.totalorder %s215, %s218
      %p224 = scmp.eq.s32.totalorder %s22, 0
      %p225 = por %p223, %p224
      %p226 = scmp.ne.s32.totalorder %s215, %s218
      %p227 = scmp.eq.s32.totalorder %s27, 1
      %p228 = por %p226, %p227
      %p229 = scmp.ne.s32.totalorder %s218, %s219
      %p230 = scmp.eq.s32.totalorder %s27, 0
      %p231 = por %p229, %p230
      %p232 = scmp.ne.s32.totalorder %s218, %s219
      %p233 = scmp.eq.s32.totalorder %s28, 1
      %p234 = por %p232, %p233
      %p236 = scmp.ne.s32.totalorder %s219, %s235
      %p237 = scmp.eq.s32.totalorder %s28, 0
      %p238 = por %p236, %p237
      %p239 = scmp.le.s32.totalorder 1, %s22
      %p240 = scmp.lt.s32.totalorder %s22, 3
      %p241 = pnand %p239, %p240
      %p242 = pneg %p241
      // Predicated region
      $region9: #{lstm_pallas.1} parent=5 // pred_check
        _
      $region10: #{lstm_pallas.1} parent=5 // pred_check_branch
        %244 = sbr.rel (%p241) target = $region12
      $region11: #{lstm_pallas.1} parent=5 // pred_region
        %s245 = ssub.s32 %s22, 1
        // Predicated region
        $region13: #{lstm_pallas.1} parent=11 // pred_check
          %p246 = pneg %p88
        $region14: #{lstm_pallas.1} parent=11 // pred_check_branch
          %248 = sbr.rel (%p246) target = $region16
        $region15: #{lstm_pallas.1} parent=11 // pred_region
          %p249 = scmp.lt.s32.totalorder %s31, 0
          %s250 = scalar_select %p249, %s31, 0
          %s251 = smul.addr %s250, 8
          %s252 = scalar_lea.vmem %s1, %s251
        $region16: #{lstm_pallas.1} parent=11 // pred_fallthru
          _
        // Predicated region
        $region17: #{lstm_pallas.1} parent=11 // pred_check
          %p253 = pneg %p109
        $region18: #{lstm_pallas.1} parent=11 // pred_check_branch
          %255 = sbr.rel (%p253) target = $region20
        $region19: #{lstm_pallas.1} parent=11 // pred_region
          %257 = vsyncadd [#allocation9], 0
          %s258 = sshll.u32 %s2, 4
          %s259 = int_to_ptr.hbm [resolvable:$true] %s258
          %s260 = sshll.u32 [#allocation8], 4
          %s261 = int_to_ptr.vmem [resolvable:$true] %s260
          %266 = dma.hbm_to_vmem [thread:$0]  %s259, 1024, %s261, [#allocation9], 256, 256, 16
        $region20: #{lstm_pallas.1} parent=11 // pred_fallthru
          _
        // Predicated region
        $region21: #{lstm_pallas.1} parent=11 // pred_check
          %p267 = pneg %p130
        $region22: #{lstm_pallas.1} parent=11 // pred_check_branch
          %269 = sbr.rel (%p267) target = $region24
        $region23: #{lstm_pallas.1} parent=11 // pred_region
          %271 = vsyncadd [#allocation9], 0
          %s272 = sshll.u32 %s3, 4
          %s273 = int_to_ptr.hbm [resolvable:$true] %s272
          %s274 = sshll.u32 [#allocation10], 4
          %s275 = int_to_ptr.vmem [resolvable:$true] %s274
          %280 = dma.hbm_to_vmem [thread:$0]  %s273, 4096, %s275, [#allocation9], 256, 256, 16
        $region24: #{lstm_pallas.1} parent=11 // pred_fallthru
          _
        // Predicated region
        $region25: #{lstm_pallas.1} parent=11 // pred_check
          %p281 = pneg %p151
        $region26: #{lstm_pallas.1} parent=11 // pred_check_branch
          %283 = sbr.rel (%p281) target = $region28
        $region27: #{lstm_pallas.1} parent=11 // pred_region
          _
        $region28: #{lstm_pallas.1} parent=11 // pred_fallthru
          _
      $region12: #{lstm_pallas.1} parent=5 // pred_fallthru
        _
      %p284 = scmp.lt.s32.totalorder %s22, 2
      // Predicated region
      $region29: #{lstm_pallas.1} parent=5 // pred_check
        %p285 = pneg %p284
      $region30: #{lstm_pallas.1} parent=5 // pred_check_branch
        %287 = sbr.rel (%p285) target = $region32
      $region31: #{lstm_pallas.1} parent=5 // pred_region
        // Predicated region
        $region33: #{lstm_pallas.1} parent=31 // pred_check
          %p288 = pneg %p56
        $region34: #{lstm_pallas.1} parent=31 // pred_check_branch
          %290 = sbr.rel (%p288) target = $region36
        $region35: #{lstm_pallas.1} parent=31 // pred_region
          %s291 = sand.u32 %s46, 1
          %s292 = scalar_lea.sflag [#allocation6], %s291
          %s293 = sand.u32 %s46, 1
          %s294 = smul.addr %s293, 16
          %s295 = scalar_lea.vmem [#allocation5], %s294
          %s296 = smul.u32 4, %s30
          %298 = vsyncadd %s292, 0
          %s299 = sadd.s32 %s29, %s296
          %s300 = smul.addr %s299, 4
          %s301 = scalar_lea.hbm %s0, %s300
          %s302 = sshll.u32 %s301, 4
          %s303 = int_to_ptr.hbm [resolvable:$true] %s302
          %s304 = sshll.u32 %s295, 4
          %s305 = int_to_ptr.vmem [resolvable:$true] %s304
          %310 = dma.hbm_to_vmem [thread:$0]  %s303, 256, %s305, %s292, 64, 64, 4
        $region36: #{lstm_pallas.1} parent=31 // pred_fallthru
          _
      $region32: #{lstm_pallas.1} parent=5 // pred_fallthru
        _
      %p311 = scmp.le.s32.totalorder 1, %s22
      %p312 = scmp.lt.s32.totalorder %s22, 3
      %p313 = pnand %p311, %p312
      %p314 = pneg %p313
      // Predicated region
      $region37: #{lstm_pallas.1} parent=5 // pred_check
        _
      $region38: #{lstm_pallas.1} parent=5 // pred_check_branch
        %316 = sbr.rel (%p313) target = $region40
      $region39: #{lstm_pallas.1} parent=5 // pred_region
        %s317 = ssub.s32 %s22, 1
        %s318 = sand.u32 %s49, 1
        %s319 = scalar_lea.sflag [#allocation6], %s318
        %s320 = sand.u32 %s49, 1
        %s321 = smul.addr %s320, 16
        %s322 = scalar_lea.vmem [#allocation5], %s321
        // Predicated region
        $region41: #{lstm_pallas.1} parent=39 // pred_check
          %p323 = pneg %p62
        $region42: #{lstm_pallas.1} parent=39 // pred_check_branch
          %325 = sbr.rel (%p323) target = $region44
        $region43: #{lstm_pallas.1} parent=39 // pred_region
          %327 = dma.done %s319, 256
        $region44: #{lstm_pallas.1} parent=39 // pred_fallthru
          _
        // Predicated region
        $region45: #{lstm_pallas.1} parent=39 // pred_check
          %p328 = pneg %p109
        $region46: #{lstm_pallas.1} parent=39 // pred_check_branch
          %330 = sbr.rel (%p328) target = $region48
        $region47: #{lstm_pallas.1} parent=39 // pred_region
          %332 = dma.done [#allocation9], 1024
        $region48: #{lstm_pallas.1} parent=39 // pred_fallthru
          _
        // Predicated region
        $region49: #{lstm_pallas.1} parent=39 // pred_check
          %p333 = pneg %p130
        $region50: #{lstm_pallas.1} parent=39 // pred_check_branch
          %335 = sbr.rel (%p333) target = $region52
        $region51: #{lstm_pallas.1} parent=39 // pred_region
          %337 = dma.done [#allocation9], 4096
        $region52: #{lstm_pallas.1} parent=39 // pred_fallthru
          _
        %s338 = sand.u32 %s49, 1
        %s339 = scalar_lea.sflag [#allocation6], %s338
        %s340 = sand.u32 %s49, 1
        %s341 = smul.addr %s340, 16
        %s342 = scalar_lea.vmem [#allocation5], %s341
        %p343 = pneg %p62
        %p344 = pneg %p59
        %p345 = scmp.lt.s32.totalorder %s31, 0
        %s346 = scalar_select %p345, %s31, 0
        %s347 = smul.addr %s346, 8
        %s348 = scalar_lea.vmem %s1, %s347
        %p349 = pneg %p88
        %p350 = pneg %p85
        %p351 = pneg %p109
        %p352 = pneg %p106
        %p353 = pneg %p130
        %p354 = pneg %p127
        %p355 = pneg %p151
        %p356 = pneg %p148
        %p357 = pneg %p179
        %p358 = pneg %p176
        %s359 = sand.u32 %s166, 1
        %s360 = scalar_lea.sflag [#allocation7], %s359
        %s361 = sand.u32 %s166, 1
        %s362 = smul.addr %s361, 32
        %s363 = scalar_lea.vmem [#allocation11], %s362
        %p364 = pneg %p205
        %p365 = pneg %p202
        %p366 = pneg %p231
        %p367 = pneg %p228
        %s368 = smul.u32 4, %s32
        %p369 = scmp.lt.s32.totalorder %s31, 0
        %s370 = scalar_select %p369, %s31, 0
        %s371 = smul.addr %s370, 8
        %s372 = scalar_lea.vmem %s1, %s371
        %s373 = smul.u32 4, %s32
        %v375 = vld [vmem:[%s322] sm:$0xf]
        %v376 = vld [vmem:[%s322 + $0x4] sm:$0xf]
        %v377 = vld [vmem:[%s322 + $0x8] sm:$0xf]
        %v378 = vld [vmem:[%s322 + $0xc] sm:$0xf]
        %v379 = vld [vmem:[#allocation8] sm:$0xff]
        %v380 = vld [vmem:[#allocation8 + $0x8] sm:$0xff]
        %v381 = vld [vmem:[#allocation8 + $0x10] sm:$0xff]
        %v382 = vld [vmem:[#allocation8 + $0x18] sm:$0xff]
        %v383 = vld [vmem:[#allocation8 + $0x20] sm:$0xff]
        %v384 = vld [vmem:[#allocation8 + $0x28] sm:$0xff]
        %v385 = vld [vmem:[#allocation8 + $0x30] sm:$0xff]
        %v386 = vld [vmem:[#allocation8 + $0x38] sm:$0xff]
        %v387 = vld [vmem:[%s4] sm:$0xf]
        %v389 = vperm.slane %v387, 0
        %v390 = vperm.slane %v387, 1
        %v391 = vperm.slane %v387, 2
        %v392 = vperm.slane %v387, 3
        %v401 = vunpack.c.l.b16 %v375
        %v402 = vunpack.c.l.b16 %v376
        %v403 = vunpack.c.l.b16 %v377
        %v404 = vunpack.c.l.b16 %v378
        %v405 = vpack.c.b16 %v402, %v401
        %v406 = vpack.c.b16 %v404, %v403
        %v415 = vunpack.c.l.b16 %v379
        %v416 = vunpack.c.h.b16 %v379
        %v417 = vunpack.c.l.b16 %v380
        %v418 = vunpack.c.h.b16 %v380
        %v419 = vunpack.c.l.b16 %v381
        %v420 = vunpack.c.h.b16 %v381
        %v421 = vunpack.c.l.b16 %v382
        %v422 = vunpack.c.h.b16 %v382
        %v423 = vunpack.c.l.b16 %v383
        %v424 = vunpack.c.h.b16 %v383
        %v425 = vunpack.c.l.b16 %v384
        %v426 = vunpack.c.h.b16 %v384
        %v427 = vunpack.c.l.b16 %v385
        %v428 = vunpack.c.h.b16 %v385
        %v429 = vunpack.c.l.b16 %v386
        %v430 = vunpack.c.h.b16 %v386
        %v431 = vpack.c.b16 %v419, %v415
        %v432 = vpack.c.b16 %v420, %v416
        %v433 = vpack.c.b16 %v421, %v417
        %v434 = vpack.c.b16 %v422, %v418
        %v435 = vpack.c.b16 %v427, %v423
        %v436 = vpack.c.b16 %v428, %v424
        %v437 = vpack.c.b16 %v429, %v425
        %v438 = vpack.c.b16 %v430, %v426
        %vm447 = vcmask 261120
        %v449 = vsel %vm447, %v405, 0
        %v452 = vsel %vm447, %v406, 0
        %454 = vmatpush.bf16.msra.mxu0 0
        %455 = vmatpush.bf16.msra.mxu0 0
        %456 = vmatpush.bf16.msra.mxu0 0
        %457 = vmatpush.bf16.msra.mxu0 0
        %458 = vmatpush.bf16.msra.mxu0 0
        %459 = vmatpush.bf16.msra.mxu0 0
        %460 = vmatpush.bf16.msra.mxu0 %v435
        %461 = vmatpush.bf16.msra.mxu0 %v431
        %462 = vmatmul.bf16.gmra.mxu0 %v449
        %v463 = vpop.f32.mrf.mxu0
        %v464 = vadd.f32 %v389, %v463
        %v465 = vpop.f32.mrf.mxu0
        %v466 = vadd.f32 %v389, %v465
        %467 = vmatmul.bf16.gmra.mxu0 %v452
        %v468 = vpop.f32.mrf.mxu0
        %v469 = vadd.f32 %v389, %v468
        %v470 = vpop.f32.mrf.mxu0
        %v471 = vadd.f32 %v389, %v470
        %472 = vdwg.mxu0
        %473 = vmatpush.bf16.msra.mxu0 0
        %474 = vmatpush.bf16.msra.mxu0 0
        %475 = vmatpush.bf16.msra.mxu0 0
        %476 = vmatpush.bf16.msra.mxu0 0
        %477 = vmatpush.bf16.msra.mxu0 0
        %478 = vmatpush.bf16.msra.mxu0 0
        %479 = vmatpush.bf16.msra.mxu0 %v436
        %480 = vmatpush.bf16.msra.mxu0 %v432
        %481 = vmatmul.bf16.gmra.mxu0 %v449
        %v482 = vpop.f32.mrf.mxu0
        %v483 = vadd.f32 %v390, %v482
        %v484 = vpop.f32.mrf.mxu0
        %v485 = vadd.f32 %v390, %v484
        %486 = vmatmul.bf16.gmra.mxu0 %v452
        %v487 = vpop.f32.mrf.mxu0
        %v488 = vadd.f32 %v390, %v487
        %v489 = vpop.f32.mrf.mxu0
        %v490 = vadd.f32 %v390, %v489
        %491 = vdwg.mxu0
        %492 = vmatpush.bf16.msra.mxu0 0
        %493 = vmatpush.bf16.msra.mxu0 0
        %494 = vmatpush.bf16.msra.mxu0 0
        %495 = vmatpush.bf16.msra.mxu0 0
        %496 = vmatpush.bf16.msra.mxu0 0
        %497 = vmatpush.bf16.msra.mxu0 0
        %498 = vmatpush.bf16.msra.mxu0 %v437
        %499 = vmatpush.bf16.msra.mxu0 %v433
        %500 = vmatmul.bf16.gmra.mxu0 %v449
        %v501 = vpop.f32.mrf.mxu0
        %v502 = vadd.f32 %v391, %v501
        %v503 = vpop.f32.mrf.mxu0
        %v504 = vadd.f32 %v391, %v503
        %505 = vmatmul.bf16.gmra.mxu0 %v452
        %v506 = vpop.f32.mrf.mxu0
        %v507 = vadd.f32 %v391, %v506
        %v508 = vpop.f32.mrf.mxu0
        %v509 = vadd.f32 %v391, %v508
        %510 = vdwg.mxu0
        %511 = vmatpush.bf16.msra.mxu0 0
        %512 = vmatpush.bf16.msra.mxu0 0
        %513 = vmatpush.bf16.msra.mxu0 0
        %514 = vmatpush.bf16.msra.mxu0 0
        %515 = vmatpush.bf16.msra.mxu0 0
        %516 = vmatpush.bf16.msra.mxu0 0
        %517 = vmatpush.bf16.msra.mxu0 %v438
        %518 = vmatpush.bf16.msra.mxu0 %v434
        %519 = vmatmul.bf16.gmra.mxu0 %v449
        %v520 = vpop.f32.mrf.mxu0
        %v521 = vadd.f32 %v392, %v520
        %v522 = vpop.f32.mrf.mxu0
        %v523 = vadd.f32 %v392, %v522
        %524 = vmatmul.bf16.gmra.mxu0 %v452
        %v525 = vpop.f32.mrf.mxu0
        %v526 = vadd.f32 %v392, %v525
        %v527 = vpop.f32.mrf.mxu0
        %v528 = vadd.f32 %v392, %v527
        %529 = vdwg.mxu0
        %530 = vst [vmem:[#allocation2] sm:$0xff] %v464
        %531 = vst [vmem:[#allocation2 + $0x8] sm:$0xff] %v483
        %532 = vst [vmem:[#allocation2 + $0x10] sm:$0xff] %v502
        %533 = vst [vmem:[#allocation2 + $0x18] sm:$0xff] %v521
        %534 = vst [vmem:[#allocation2 + $0x20] sm:$0xff] %v466
        %535 = vst [vmem:[#allocation2 + $0x28] sm:$0xff] %v485
        %536 = vst [vmem:[#allocation2 + $0x30] sm:$0xff] %v504
        %537 = vst [vmem:[#allocation2 + $0x38] sm:$0xff] %v523
        %538 = vst [vmem:[#allocation2 + $0x40] sm:$0xff] %v469
        %539 = vst [vmem:[#allocation2 + $0x48] sm:$0xff] %v488
        %540 = vst [vmem:[#allocation2 + $0x50] sm:$0xff] %v507
        %541 = vst [vmem:[#allocation2 + $0x58] sm:$0xff] %v526
        %542 = vst [vmem:[#allocation2 + $0x60] sm:$0xff] %v471
        %543 = vst [vmem:[#allocation2 + $0x68] sm:$0xff] %v490
        %544 = vst [vmem:[#allocation2 + $0x70] sm:$0xff] %v509
        %545 = vst [vmem:[#allocation2 + $0x78] sm:$0xff] %v528
        %s546 = smul.u32 %s32, 4
        %v547 = vlaneseq
        %v548 = vand.u32 %v547, 127
        %v549 = vstv %s546
        %v550 = vadd.s32 %v549, %v548
        %v551 = vld [vmem:[%s372] sm:$0xff]
        %552 = vset.pattern.permute.xlu0 0
        %553 = vperm.xlu0 %552, %v551
        %v554 = vpop.permute.xlu0 %553
        %vm555 = vcmp.gt.s32.totalorder %v554, %v550
        %p556 = scmp.eq.s32.totalorder %s32, 0
        // Predicated region
        $region53: #{lstm_pallas.1} parent=39 // pred_check
          %p557 = pneg %p556
        $region54: #{lstm_pallas.1} parent=39 // pred_check_branch
          %559 = sbr.rel (%p557) target = $region56
        $region55: #{lstm_pallas.1} parent=39 // pred_region
          %560 = vst [vmem:[#allocation3] sm:$0xff] 0.0
          %561 = vst [vmem:[#allocation4] sm:$0xff] 0.0
        $region56: #{lstm_pallas.1} parent=39 // pred_fallthru
          _
        %v562 = vld [vmem:[#allocation3] sm:$0xff]
        %v563 = vld [vmem:[#allocation4] sm:$0xff]
        %v564 = vld [vmem:[#allocation2] sm:$0xff]
        %v565 = vld [vmem:[#allocation2 + $0x8] sm:$0xff]
        %v566 = vld [vmem:[#allocation2 + $0x10] sm:$0xff]
        %v567 = vld [vmem:[#allocation2 + $0x18] sm:$0xff]
        %v568 = vpack.c.bf16 %v562, %v562
        %v569 = vld [vmem:[#allocation10] sm:$0xff]
        %v570 = vld [vmem:[#allocation10 + $0x8] sm:$0xff]
        %v571 = vld [vmem:[#allocation10 + $0x10] sm:$0xff]
        %v572 = vld [vmem:[#allocation10 + $0x18] sm:$0xff]
        %v573 = vld [vmem:[#allocation10 + $0x20] sm:$0xff]
        %v574 = vld [vmem:[#allocation10 + $0x28] sm:$0xff]
        %v575 = vld [vmem:[#allocation10 + $0x30] sm:$0xff]
        %v576 = vld [vmem:[#allocation10 + $0x38] sm:$0xff]
        %v577 = vld [vmem:[#allocation10 + $0x40] sm:$0xff]
        %v578 = vld [vmem:[#allocation10 + $0x48] sm:$0xff]
        %v579 = vld [vmem:[#allocation10 + $0x50] sm:$0xff]
        %v580 = vld [vmem:[#allocation10 + $0x58] sm:$0xff]
        %v581 = vld [vmem:[#allocation10 + $0x60] sm:$0xff]
        %v582 = vld [vmem:[#allocation10 + $0x68] sm:$0xff]
        %v583 = vld [vmem:[#allocation10 + $0x70] sm:$0xff]
        %v584 = vld [vmem:[#allocation10 + $0x78] sm:$0xff]
        %v585 = vld [vmem:[#allocation10 + $0x80] sm:$0xff]
        %v586 = vld [vmem:[#allocation10 + $0x88] sm:$0xff]
        %v587 = vld [vmem:[#allocation10 + $0x90] sm:$0xff]
        %v588 = vld [vmem:[#allocation10 + $0x98] sm:$0xff]
        %v589 = vld [vmem:[#allocation10 + $0xa0] sm:$0xff]
        %v590 = vld [vmem:[#allocation10 + $0xa8] sm:$0xff]
        %v591 = vld [vmem:[#allocation10 + $0xb0] sm:$0xff]
        %v592 = vld [vmem:[#allocation10 + $0xb8] sm:$0xff]
        %v593 = vld [vmem:[#allocation10 + $0xc0] sm:$0xff]
        %v594 = vld [vmem:[#allocation10 + $0xc8] sm:$0xff]
        %v595 = vld [vmem:[#allocation10 + $0xd0] sm:$0xff]
        %v596 = vld [vmem:[#allocation10 + $0xd8] sm:$0xff]
        %v597 = vld [vmem:[#allocation10 + $0xe0] sm:$0xff]
        %v598 = vld [vmem:[#allocation10 + $0xe8] sm:$0xff]
        %v599 = vld [vmem:[#allocation10 + $0xf0] sm:$0xff]
        %v600 = vld [vmem:[#allocation10 + $0xf8] sm:$0xff]
        %v633 = vunpack.c.l.b16 %v569
        %v634 = vunpack.c.h.b16 %v569
        %v635 = vunpack.c.l.b16 %v570
        %v636 = vunpack.c.h.b16 %v570
        %v637 = vunpack.c.l.b16 %v571
        %v638 = vunpack.c.h.b16 %v571
        %v639 = vunpack.c.l.b16 %v572
        %v640 = vunpack.c.h.b16 %v572
        %v641 = vunpack.c.l.b16 %v573
        %v642 = vunpack.c.h.b16 %v573
        %v643 = vunpack.c.l.b16 %v574
        %v644 = vunpack.c.h.b16 %v574
        %v645 = vunpack.c.l.b16 %v575
        %v646 = vunpack.c.h.b16 %v575
        %v647 = vunpack.c.l.b16 %v576
        %v648 = vunpack.c.h.b16 %v576
        %v649 = vunpack.c.l.b16 %v577
        %v650 = vunpack.c.h.b16 %v577
        %v651 = vunpack.c.l.b16 %v578
        %v652 = vunpack.c.h.b16 %v578
        %v653 = vunpack.c.l.b16 %v579
        %v654 = vunpack.c.h.b16 %v579
        %v655 = vunpack.c.l.b16 %v580
        %v656 = vunpack.c.h.b16 %v580
        %v657 = vunpack.c.l.b16 %v581
        %v658 = vunpack.c.h.b16 %v581
        %v659 = vunpack.c.l.b16 %v582
        %v660 = vunpack.c.h.b16 %v582
        %v661 = vunpack.c.l.b16 %v583
        %v662 = vunpack.c.h.b16 %v583
        %v663 = vunpack.c.l.b16 %v584
        %v664 = vunpack.c.h.b16 %v584
        %v665 = vunpack.c.l.b16 %v585
        %v666 = vunpack.c.h.b16 %v585
        %v667 = vunpack.c.l.b16 %v586
        %v668 = vunpack.c.h.b16 %v586
        %v669 = vunpack.c.l.b16 %v587
        %v670 = vunpack.c.h.b16 %v587
        %v671 = vunpack.c.l.b16 %v588
        %v672 = vunpack.c.h.b16 %v588
        %v673 = vunpack.c.l.b16 %v589
        %v674 = vunpack.c.h.b16 %v589
        %v675 = vunpack.c.l.b16 %v590
        %v676 = vunpack.c.h.b16 %v590
        %v677 = vunpack.c.l.b16 %v591
        %v678 = vunpack.c.h.b16 %v591
        %v679 = vunpack.c.l.b16 %v592
        %v680 = vunpack.c.h.b16 %v592
        %v681 = vunpack.c.l.b16 %v593
        %v682 = vunpack.c.h.b16 %v593
        %v683 = vunpack.c.l.b16 %v594
        %v684 = vunpack.c.h.b16 %v594
        %v685 = vunpack.c.l.b16 %v595
        %v686 = vunpack.c.h.b16 %v595
        %v687 = vunpack.c.l.b16 %v596
        %v688 = vunpack.c.h.b16 %v596
        %v689 = vunpack.c.l.b16 %v597
        %v690 = vunpack.c.h.b16 %v597
        %v691 = vunpack.c.l.b16 %v598
        %v692 = vunpack.c.h.b16 %v598
        %v693 = vunpack.c.l.b16 %v599
        %v694 = vunpack.c.h.b16 %v599
        %v695 = vunpack.c.l.b16 %v600
        %v696 = vunpack.c.h.b16 %v600
        %v697 = vpack.c.b16 %v637, %v633
        %v698 = vpack.c.b16 %v638, %v634
        %v699 = vpack.c.b16 %v639, %v635
        %v700 = vpack.c.b16 %v640, %v636
        %v701 = vpack.c.b16 %v645, %v641
        %v702 = vpack.c.b16 %v646, %v642
        %v703 = vpack.c.b16 %v647, %v643
        %v704 = vpack.c.b16 %v648, %v644
        %v705 = vpack.c.b16 %v653, %v649
        %v706 = vpack.c.b16 %v654, %v650
        %v707 = vpack.c.b16 %v655, %v651
        %v708 = vpack.c.b16 %v656, %v652
        %v709 = vpack.c.b16 %v661, %v657
        %v710 = vpack.c.b16 %v662, %v658
        %v711 = vpack.c.b16 %v663, %v659
        %v712 = vpack.c.b16 %v664, %v660
        %v713 = vpack.c.b16 %v669, %v665
        %v714 = vpack.c.b16 %v670, %v666
        %v715 = vpack.c.b16 %v671, %v667
        %v716 = vpack.c.b16 %v672, %v668
        %v717 = vpack.c.b16 %v677, %v673
        %v718 = vpack.c.b16 %v678, %v674
        %v719 = vpack.c.b16 %v679, %v675
        %v720 = vpack.c.b16 %v680, %v676
        %v721 = vpack.c.b16 %v685, %v681
        %v722 = vpack.c.b16 %v686, %v682
        %v723 = vpack.c.b16 %v687, %v683
        %v724 = vpack.c.b16 %v688, %v684
        %v725 = vpack.c.b16 %v693, %v689
        %v726 = vpack.c.b16 %v694, %v690
        %v727 = vpack.c.b16 %v695, %v691
        %v728 = vpack.c.b16 %v696, %v692
        %761 = vmatpush.bf16.msra.mxu0 %v725
        %762 = vmatpush.bf16.msra.mxu0 %v721
        %763 = vmatpush.bf16.msra.mxu0 %v717
        %764 = vmatpush.bf16.msra.mxu0 %v713
        %765 = vmatpush.bf16.msra.mxu0 %v709
        %766 = vmatpush.bf16.msra.mxu0 %v705
        %767 = vmatpush.bf16.msra.mxu0 %v701
        %768 = vmatpush.bf16.msra.mxu0 %v697
        %769 = vmatmul.bf16.gmra.mxu0 %v568
        %v770 = vpop.f32.mrf.mxu0
        %v771 = vadd.f32 0.0, %v770
        %v772 = vpop.f32.mrf.mxu0
        %773 = vdwg.mxu0
        %774 = vmatpush.bf16.msra.mxu0 %v726
        %775 = vmatpush.bf16.msra.mxu0 %v722
        %776 = vmatpush.bf16.msra.mxu0 %v718
        %777 = vmatpush.bf16.msra.mxu0 %v714
        %778 = vmatpush.bf16.msra.mxu0 %v710
        %779 = vmatpush.bf16.msra.mxu0 %v706
        %780 = vmatpush.bf16.msra.mxu0 %v702
        %781 = vmatpush.bf16.msra.mxu0 %v698
        %782 = vmatmul.bf16.gmra.mxu0 %v568
        %v783 = vpop.f32.mrf.mxu0
        %v784 = vadd.f32 0.0, %v783
        %v785 = vpop.f32.mrf.mxu0
        %786 = vdwg.mxu0
        %787 = vmatpush.bf16.msra.mxu0 %v727
        %788 = vmatpush.bf16.msra.mxu0 %v723
        %789 = vmatpush.bf16.msra.mxu0 %v719
        %790 = vmatpush.bf16.msra.mxu0 %v715
        %791 = vmatpush.bf16.msra.mxu0 %v711
        %792 = vmatpush.bf16.msra.mxu0 %v707
        %793 = vmatpush.bf16.msra.mxu0 %v703
        %794 = vmatpush.bf16.msra.mxu0 %v699
        %795 = vmatmul.bf16.gmra.mxu0 %v568
        %v796 = vpop.f32.mrf.mxu0
        %v797 = vadd.f32 0.0, %v796
        %v798 = vpop.f32.mrf.mxu0
        %799 = vdwg.mxu0
        %800 = vmatpush.bf16.msra.mxu0 %v728
        %801 = vmatpush.bf16.msra.mxu0 %v724
        %802 = vmatpush.bf16.msra.mxu0 %v720
        %803 = vmatpush.bf16.msra.mxu0 %v716
        %804 = vmatpush.bf16.msra.mxu0 %v712
        %805 = vmatpush.bf16.msra.mxu0 %v708
        %806 = vmatpush.bf16.msra.mxu0 %v704
        %807 = vmatpush.bf16.msra.mxu0 %v700
        %808 = vmatmul.bf16.gmra.mxu0 %v568
        %v809 = vpop.f32.mrf.mxu0
        %v810 = vadd.f32 0.0, %v809
        %v811 = vpop.f32.mrf.mxu0
        %812 = vdwg.mxu0
        %v813 = vadd.f32 %v564, %v771
        %v814 = vadd.f32 %v565, %v784
        %v815 = vadd.f32 %v566, %v797
        %v816 = vadd.f32 %v567, %v810
        %v817 = vxor.u32 %v813, 2147483648
        %v818 = vmul.f32 %v817, 1.442695
        %v819 = vpow.pop %v818
        %v820 = vadd.f32 %v819, 1.0
        %v821 = vrcp.pop %v820
        %v822 = vmul.f32 %v820, %v821
        %v823 = vsub.f32 1.0, %v822
        %v824 = vmul.f32 %v821, %v823
        %v825 = vadd.f32 %v821, %v824
        %vm826 = vweird.f32 %v820
        %vm827 = vweird.f32 %v821
        %vm828 = vmor %vm826, %vm827
        %v829 = vsel %vm828, %v821, %v825
        %v830 = vand.u32 2147483647, %v820
        %vm831 = vcmp.eq.f32.partialorder %v830, 8.507059e+37
        %v832 = vand.u32 %v820, 2147483648
        %v833 = vor.u32 1.1754944e-38, %v832
        %v834 = vsel %vm831, %v833, %v829
        %v835 = vmul.f32 1.0, %v834
        %v836 = vxor.u32 %v814, 2147483648
        %v837 = vmul.f32 %v836, 1.442695
        %v838 = vpow.pop %v837
        %v839 = vadd.f32 %v838, 1.0
        %v840 = vrcp.pop %v839
        %v841 = vmul.f32 %v839, %v840
        %v842 = vsub.f32 1.0, %v841
        %v843 = vmul.f32 %v840, %v842
        %v844 = vadd.f32 %v840, %v843
        %vm845 = vweird.f32 %v839
        %vm846 = vweird.f32 %v840
        %vm847 = vmor %vm845, %vm846
        %v848 = vsel %vm847, %v840, %v844
        %v849 = vand.u32 2147483647, %v839
        %vm850 = vcmp.eq.f32.partialorder %v849, 8.507059e+37
        %v851 = vand.u32 %v839, 2147483648
        %v852 = vor.u32 1.1754944e-38, %v851
        %v853 = vsel %vm850, %v852, %v848
        %v854 = vmul.f32 1.0, %v853
        %v855 = vtanh.pop %v815
        %v856 = vxor.u32 %v816, 2147483648
        %v857 = vmul.f32 %v856, 1.442695
        %v858 = vpow.pop %v857
        %v859 = vadd.f32 %v858, 1.0
        %v860 = vrcp.pop %v859
        %v861 = vmul.f32 %v859, %v860
        %v862 = vsub.f32 1.0, %v861
        %v863 = vmul.f32 %v860, %v862
        %v864 = vadd.f32 %v860, %v863
        %vm865 = vweird.f32 %v859
        %vm866 = vweird.f32 %v860
        %vm867 = vmor %vm865, %vm866
        %v868 = vsel %vm867, %v860, %v864
        %v869 = vand.u32 2147483647, %v859
        %vm870 = vcmp.eq.f32.partialorder %v869, 8.507059e+37
        %v871 = vand.u32 %v859, 2147483648
        %v872 = vor.u32 1.1754944e-38, %v871
        %v873 = vsel %vm870, %v872, %v868
        %v874 = vmul.f32 1.0, %v873
        %v875 = vmul.f32 %v854, %v563
        %v876 = vmul.f32 %v835, %v855
        %v877 = vadd.f32 %v875, %v876
        %v878 = vtanh.pop %v877
        %v879 = vmul.f32 %v874, %v878
        %v880 = vsel %vm555, 1, 0
        %881 = vset.pattern.permute.xlu0 0
        %882 = vperm.xlu0 %881, %v880
        %v883 = vpop.permute.xlu0 %882
        %vm884 = vcmp.eq.s32.totalorder %v883, 1
        %v885 = vsel %vm884, %v879, %v562
        %v886 = vsel %vm884, %v877, %v563
        %v887 = vsel %vm884, %v879, 0.0
        %888 = vst [vmem:[%s363] sm:$0xff] %v887
        %s889 = scalar_lea.vmem [#allocation2], 32
        %v890 = vld [vmem:[%s889] sm:$0xff]
        %v891 = vld [vmem:[%s889 + $0x8] sm:$0xff]
        %v892 = vld [vmem:[%s889 + $0x10] sm:$0xff]
        %v893 = vld [vmem:[%s889 + $0x18] sm:$0xff]
        %v894 = vpack.c.bf16 %v885, %v885
        %v895 = vld [vmem:[#allocation10] sm:$0xff]
        %v896 = vld [vmem:[#allocation10 + $0x8] sm:$0xff]
        %v897 = vld [vmem:[#allocation10 + $0x10] sm:$0xff]
        %v898 = vld [vmem:[#allocation10 + $0x18] sm:$0xff]
        %v899 = vld [vmem:[#allocation10 + $0x20] sm:$0xff]
        %v900 = vld [vmem:[#allocation10 + $0x28] sm:$0xff]
        %v901 = vld [vmem:[#allocation10 + $0x30] sm:$0xff]
        %v902 = vld [vmem:[#allocation10 + $0x38] sm:$0xff]
        %v903 = vld [vmem:[#allocation10 + $0x40] sm:$0xff]
        %v904 = vld [vmem:[#allocation10 + $0x48] sm:$0xff]
        %v905 = vld [vmem:[#allocation10 + $0x50] sm:$0xff]
        %v906 = vld [vmem:[#allocation10 + $0x58] sm:$0xff]
        %v907 = vld [vmem:[#allocation10 + $0x60] sm:$0xff]
        %v908 = vld [vmem:[#allocation10 + $0x68] sm:$0xff]
        %v909 = vld [vmem:[#allocation10 + $0x70] sm:$0xff]
        %v910 = vld [vmem:[#allocation10 + $0x78] sm:$0xff]
        %v911 = vld [vmem:[#allocation10 + $0x80] sm:$0xff]
        %v912 = vld [vmem:[#allocation10 + $0x88] sm:$0xff]
        %v913 = vld [vmem:[#allocation10 + $0x90] sm:$0xff]
        %v914 = vld [vmem:[#allocation10 + $0x98] sm:$0xff]
        %v915 = vld [vmem:[#allocation10 + $0xa0] sm:$0xff]
        %v916 = vld [vmem:[#allocation10 + $0xa8] sm:$0xff]
        %v917 = vld [vmem:[#allocation10 + $0xb0] sm:$0xff]
        %v918 = vld [vmem:[#allocation10 + $0xb8] sm:$0xff]
        %v919 = vld [vmem:[#allocation10 + $0xc0] sm:$0xff]
        %v920 = vld [vmem:[#allocation10 + $0xc8] sm:$0xff]
        %v921 = vld [vmem:[#allocation10 + $0xd0] sm:$0xff]
        %v922 = vld [vmem:[#allocation10 + $0xd8] sm:$0xff]
        %v923 = vld [vmem:[#allocation10 + $0xe0] sm:$0xff]
        %v924 = vld [vmem:[#allocation10 + $0xe8] sm:$0xff]
        %v925 = vld [vmem:[#allocation10 + $0xf0] sm:$0xff]
        %v926 = vld [vmem:[#allocation10 + $0xf8] sm:$0xff]
        %v959 = vunpack.c.l.b16 %v895
        %v960 = vunpack.c.h.b16 %v895
        %v961 = vunpack.c.l.b16 %v896
        %v962 = vunpack.c.h.b16 %v896
        %v963 = vunpack.c.l.b16 %v897
        %v964 = vunpack.c.h.b16 %v897
        %v965 = vunpack.c.l.b16 %v898
        %v966 = vunpack.c.h.b16 %v898
        %v967 = vunpack.c.l.b16 %v899
        %v968 = vunpack.c.h.b16 %v899
        %v969 = vunpack.c.l.b16 %v900
        %v970 = vunpack.c.h.b16 %v900
        %v971 = vunpack.c.l.b16 %v901
        %v972 = vunpack.c.h.b16 %v901
        %v973 = vunpack.c.l.b16 %v902
        %v974 = vunpack.c.h.b16 %v902
        %v975 = vunpack.c.l.b16 %v903
        %v976 = vunpack.c.h.b16 %v903
        %v977 = vunpack.c.l.b16 %v904
        %v978 = vunpack.c.h.b16 %v904
        %v979 = vunpack.c.l.b16 %v905
        %v980 = vunpack.c.h.b16 %v905
        %v981 = vunpack.c.l.b16 %v906
        %v982 = vunpack.c.h.b16 %v906
        %v983 = vunpack.c.l.b16 %v907
        %v984 = vunpack.c.h.b16 %v907
        %v985 = vunpack.c.l.b16 %v908
        %v986 = vunpack.c.h.b16 %v908
        %v987 = vunpack.c.l.b16 %v909
        %v988 = vunpack.c.h.b16 %v909
        %v989 = vunpack.c.l.b16 %v910
        %v990 = vunpack.c.h.b16 %v910
        %v991 = vunpack.c.l.b16 %v911
        %v992 = vunpack.c.h.b16 %v911
        %v993 = vunpack.c.l.b16 %v912
        %v994 = vunpack.c.h.b16 %v912
        %v995 = vunpack.c.l.b16 %v913
        %v996 = vunpack.c.h.b16 %v913
        %v997 = vunpack.c.l.b16 %v914
        %v998 = vunpack.c.h.b16 %v914
        %v999 = vunpack.c.l.b16 %v915
        %v1000 = vunpack.c.h.b16 %v915
        %v1001 = vunpack.c.l.b16 %v916
        %v1002 = vunpack.c.h.b16 %v916
        %v1003 = vunpack.c.l.b16 %v917
        %v1004 = vunpack.c.h.b16 %v917
        %v1005 = vunpack.c.l.b16 %v918
        %v1006 = vunpack.c.h.b16 %v918
        %v1007 = vunpack.c.l.b16 %v919
        %v1008 = vunpack.c.h.b16 %v919
        %v1009 = vunpack.c.l.b16 %v920
        %v1010 = vunpack.c.h.b16 %v920
        %v1011 = vunpack.c.l.b16 %v921
        %v1012 = vunpack.c.h.b16 %v921
        %v1013 = vunpack.c.l.b16 %v922
        %v1014 = vunpack.c.h.b16 %v922
        %v1015 = vunpack.c.l.b16 %v923
        %v1016 = vunpack.c.h.b16 %v923
        %v1017 = vunpack.c.l.b16 %v924
        %v1018 = vunpack.c.h.b16 %v924
        %v1019 = vunpack.c.l.b16 %v925
        %v1020 = vunpack.c.h.b16 %v925
        %v1021 = vunpack.c.l.b16 %v926
        %v1022 = vunpack.c.h.b16 %v926
        %v1023 = vpack.c.b16 %v963, %v959
        %v1024 = vpack.c.b16 %v964, %v960
        %v1025 = vpack.c.b16 %v965, %v961
        %v1026 = vpack.c.b16 %v966, %v962
        %v1027 = vpack.c.b16 %v971, %v967
        %v1028 = vpack.c.b16 %v972, %v968
        %v1029 = vpack.c.b16 %v973, %v969
        %v1030 = vpack.c.b16 %v974, %v970
        %v1031 = vpack.c.b16 %v979, %v975
        %v1032 = vpack.c.b16 %v980, %v976
        %v1033 = vpack.c.b16 %v981, %v977
        %v1034 = vpack.c.b16 %v982, %v978
        %v1035 = vpack.c.b16 %v987, %v983
        %v1036 = vpack.c.b16 %v988, %v984
        %v1037 = vpack.c.b16 %v989, %v985
        %v1038 = vpack.c.b16 %v990, %v986
        %v1039 = vpack.c.b16 %v995, %v991
        %v1040 = vpack.c.b16 %v996, %v992
        %v1041 = vpack.c.b16 %v997, %v993
        %v1042 = vpack.c.b16 %v998, %v994
        %v1043 = vpack.c.b16 %v1003, %v999
        %v1044 = vpack.c.b16 %v1004, %v1000
        %v1045 = vpack.c.b16 %v1005, %v1001
        %v1046 = vpack.c.b16 %v1006, %v1002
        %v1047 = vpack.c.b16 %v1011, %v1007
        %v1048 = vpack.c.b16 %v1012, %v1008
        %v1049 = vpack.c.b16 %v1013, %v1009
        %v1050 = vpack.c.b16 %v1014, %v1010
        %v1051 = vpack.c.b16 %v1019, %v1015
        %v1052 = vpack.c.b16 %v1020, %v1016
        %v1053 = vpack.c.b16 %v1021, %v1017
        %v1054 = vpack.c.b16 %v1022, %v1018
        %1087 = vmatpush.bf16.msra.mxu0 %v1051
        %1088 = vmatpush.bf16.msra.mxu0 %v1047
        %1089 = vmatpush.bf16.msra.mxu0 %v1043
        %1090 = vmatpush.bf16.msra.mxu0 %v1039
        %1091 = vmatpush.bf16.msra.mxu0 %v1035
        %1092 = vmatpush.bf16.msra.mxu0 %v1031
        %1093 = vmatpush.bf16.msra.mxu0 %v1027
        %1094 = vmatpush.bf16.msra.mxu0 %v1023
        %1095 = vmatmul.bf16.gmra.mxu0 %v894
        %v1096 = vpop.f32.mrf.mxu0
        %v1097 = vadd.f32 0.0, %v1096
        %v1098 = vpop.f32.mrf.mxu0
        %1099 = vdwg.mxu0
        %1100 = vmatpush.bf16.msra.mxu0 %v1052
        %1101 = vmatpush.bf16.msra.mxu0 %v1048
        %1102 = vmatpush.bf16.msra.mxu0 %v1044
        %1103 = vmatpush.bf16.msra.mxu0 %v1040
        %1104 = vmatpush.bf16.msra.mxu0 %v1036
        %1105 = vmatpush.bf16.msra.mxu0 %v1032
        %1106 = vmatpush.bf16.msra.mxu0 %v1028
        %1107 = vmatpush.bf16.msra.mxu0 %v1024
        %1108 = vmatmul.bf16.gmra.mxu0 %v894
        %v1109 = vpop.f32.mrf.mxu0
        %v1110 = vadd.f32 0.0, %v1109
        %v1111 = vpop.f32.mrf.mxu0
        %1112 = vdwg.mxu0
        %1113 = vmatpush.bf16.msra.mxu0 %v1053
        %1114 = vmatpush.bf16.msra.mxu0 %v1049
        %1115 = vmatpush.bf16.msra.mxu0 %v1045
        %1116 = vmatpush.bf16.msra.mxu0 %v1041
        %1117 = vmatpush.bf16.msra.mxu0 %v1037
        %1118 = vmatpush.bf16.msra.mxu0 %v1033
        %1119 = vmatpush.bf16.msra.mxu0 %v1029
        %1120 = vmatpush.bf16.msra.mxu0 %v1025
        %1121 = vmatmul.bf16.gmra.mxu0 %v894
        %v1122 = vpop.f32.mrf.mxu0
        %v1123 = vadd.f32 0.0, %v1122
        %v1124 = vpop.f32.mrf.mxu0
        %1125 = vdwg.mxu0
        %1126 = vmatpush.bf16.msra.mxu0 %v1054
        %1127 = vmatpush.bf16.msra.mxu0 %v1050
        %1128 = vmatpush.bf16.msra.mxu0 %v1046
        %1129 = vmatpush.bf16.msra.mxu0 %v1042
        %1130 = vmatpush.bf16.msra.mxu0 %v1038
        %1131 = vmatpush.bf16.msra.mxu0 %v1034
        %1132 = vmatpush.bf16.msra.mxu0 %v1030
        %1133 = vmatpush.bf16.msra.mxu0 %v1026
        %1134 = vmatmul.bf16.gmra.mxu0 %v894
        %v1135 = vpop.f32.mrf.mxu0
        %v1136 = vadd.f32 0.0, %v1135
        %v1137 = vpop.f32.mrf.mxu0
        %1138 = vdwg.mxu0
        %v1139 = vadd.f32 %v890, %v1097
        %v1140 = vadd.f32 %v891, %v1110
        %v1141 = vadd.f32 %v892, %v1123
        %v1142 = vadd.f32 %v893, %v1136
        %v1143 = vxor.u32 %v1139, 2147483648
        %v1144 = vmul.f32 %v1143, 1.442695
        %v1145 = vpow.pop %v1144
        %v1146 = vadd.f32 %v1145, 1.0
        %v1147 = vrcp.pop %v1146
        %v1148 = vmul.f32 %v1146, %v1147
        %v1149 = vsub.f32 1.0, %v1148
        %v1150 = vmul.f32 %v1147, %v1149
        %v1151 = vadd.f32 %v1147, %v1150
        %vm1152 = vweird.f32 %v1146
        %vm1153 = vweird.f32 %v1147
        %vm1154 = vmor %vm1152, %vm1153
        %v1155 = vsel %vm1154, %v1147, %v1151
        %v1156 = vand.u32 2147483647, %v1146
        %vm1157 = vcmp.eq.f32.partialorder %v1156, 8.507059e+37
        %v1158 = vand.u32 %v1146, 2147483648
        %v1159 = vor.u32 1.1754944e-38, %v1158
        %v1160 = vsel %vm1157, %v1159, %v1155
        %v1161 = vmul.f32 1.0, %v1160
        %v1162 = vxor.u32 %v1140, 2147483648
        %v1163 = vmul.f32 %v1162, 1.442695
        %v1164 = vpow.pop %v1163
        %v1165 = vadd.f32 %v1164, 1.0
        %v1166 = vrcp.pop %v1165
        %v1167 = vmul.f32 %v1165, %v1166
        %v1168 = vsub.f32 1.0, %v1167
        %v1169 = vmul.f32 %v1166, %v1168
        %v1170 = vadd.f32 %v1166, %v1169
        %vm1171 = vweird.f32 %v1165
        %vm1172 = vweird.f32 %v1166
        %vm1173 = vmor %vm1171, %vm1172
        %v1174 = vsel %vm1173, %v1166, %v1170
        %v1175 = vand.u32 2147483647, %v1165
        %vm1176 = vcmp.eq.f32.partialorder %v1175, 8.507059e+37
        %v1177 = vand.u32 %v1165, 2147483648
        %v1178 = vor.u32 1.1754944e-38, %v1177
        %v1179 = vsel %vm1176, %v1178, %v1174
        %v1180 = vmul.f32 1.0, %v1179
        %v1181 = vtanh.pop %v1141
        %v1182 = vxor.u32 %v1142, 2147483648
        %v1183 = vmul.f32 %v1182, 1.442695
        %v1184 = vpow.pop %v1183
        %v1185 = vadd.f32 %v1184, 1.0
        %v1186 = vrcp.pop %v1185
        %v1187 = vmul.f32 %v1185, %v1186
        %v1188 = vsub.f32 1.0, %v1187
        %v1189 = vmul.f32 %v1186, %v1188
        %v1190 = vadd.f32 %v1186, %v1189
        %vm1191 = vweird.f32 %v1185
        %vm1192 = vweird.f32 %v1186
        %vm1193 = vmor %vm1191, %vm1192
        %v1194 = vsel %vm1193, %v1186, %v1190
        %v1195 = vand.u32 2147483647, %v1185
        %vm1196 = vcmp.eq.f32.partialorder %v1195, 8.507059e+37
        %v1197 = vand.u32 %v1185, 2147483648
        %v1198 = vor.u32 1.1754944e-38, %v1197
        %v1199 = vsel %vm1196, %v1198, %v1194
        %v1200 = vmul.f32 1.0, %v1199
        %v1201 = vmul.f32 %v1180, %v886
        %v1202 = vmul.f32 %v1161, %v1181
        %v1203 = vadd.f32 %v1201, %v1202
        %v1204 = vtanh.pop %v1203
        %v1205 = vmul.f32 %v1200, %v1204
        %1206 = vset.pattern.permute.xlu0 1
        %1207 = vperm.xlu0 %1206, %v880
        %v1208 = vpop.permute.xlu0 %1207
        %vm1209 = vcmp.eq.s32.totalorder %v1208, 1
        %v1210 = vsel %vm1209, %v1205, %v885
        %v1211 = vsel %vm1209, %v1203, %v886
        %v1212 = vsel %vm1209, %v1205, 0.0
        %s1213 = scalar_lea.vmem %s363, 8 [#allocation11]
        %1214 = vst [vmem:[%s1213] sm:$0xff] %v1212
        %s1215 = scalar_lea.vmem [#allocation2], 64
        %v1216 = vld [vmem:[%s1215] sm:$0xff]
        %v1217 = vld [vmem:[%s1215 + $0x8] sm:$0xff]
        %v1218 = vld [vmem:[%s1215 + $0x10] sm:$0xff]
        %v1219 = vld [vmem:[%s1215 + $0x18] sm:$0xff]
        %v1220 = vpack.c.bf16 %v1210, %v1210
        %v1221 = vld [vmem:[#allocation10] sm:$0xff]
        %v1222 = vld [vmem:[#allocation10 + $0x8] sm:$0xff]
        %v1223 = vld [vmem:[#allocation10 + $0x10] sm:$0xff]
        %v1224 = vld [vmem:[#allocation10 + $0x18] sm:$0xff]
        %v1225 = vld [vmem:[#allocation10 + $0x20] sm:$0xff]
        %v1226 = vld [vmem:[#allocation10 + $0x28] sm:$0xff]
        %v1227 = vld [vmem:[#allocation10 + $0x30] sm:$0xff]
        %v1228 = vld [vmem:[#allocation10 + $0x38] sm:$0xff]
        %v1229 = vld [vmem:[#allocation10 + $0x40] sm:$0xff]
        %v1230 = vld [vmem:[#allocation10 + $0x48] sm:$0xff]
        %v1231 = vld [vmem:[#allocation10 + $0x50] sm:$0xff]
        %v1232 = vld [vmem:[#allocation10 + $0x58] sm:$0xff]
        %v1233 = vld [vmem:[#allocation10 + $0x60] sm:$0xff]
        %v1234 = vld [vmem:[#allocation10 + $0x68] sm:$0xff]
        %v1235 = vld [vmem:[#allocation10 + $0x70] sm:$0xff]
        %v1236 = vld [vmem:[#allocation10 + $0x78] sm:$0xff]
        %v1237 = vld [vmem:[#allocation10 + $0x80] sm:$0xff]
        %v1238 = vld [vmem:[#allocation10 + $0x88] sm:$0xff]
        %v1239 = vld [vmem:[#allocation10 + $0x90] sm:$0xff]
        %v1240 = vld [vmem:[#allocation10 + $0x98] sm:$0xff]
        %v1241 = vld [vmem:[#allocation10 + $0xa0] sm:$0xff]
        %v1242 = vld [vmem:[#allocation10 + $0xa8] sm:$0xff]
        %v1243 = vld [vmem:[#allocation10 + $0xb0] sm:$0xff]
        %v1244 = vld [vmem:[#allocation10 + $0xb8] sm:$0xff]
        %v1245 = vld [vmem:[#allocation10 + $0xc0] sm:$0xff]
        %v1246 = vld [vmem:[#allocation10 + $0xc8] sm:$0xff]
        %v1247 = vld [vmem:[#allocation10 + $0xd0] sm:$0xff]
        %v1248 = vld [vmem:[#allocation10 + $0xd8] sm:$0xff]
        %v1249 = vld [vmem:[#allocation10 + $0xe0] sm:$0xff]
        %v1250 = vld [vmem:[#allocation10 + $0xe8] sm:$0xff]
        %v1251 = vld [vmem:[#allocation10 + $0xf0] sm:$0xff]
        %v1252 = vld [vmem:[#allocation10 + $0xf8] sm:$0xff]
        %v1285 = vunpack.c.l.b16 %v1221
        %v1286 = vunpack.c.h.b16 %v1221
        %v1287 = vunpack.c.l.b16 %v1222
        %v1288 = vunpack.c.h.b16 %v1222
        %v1289 = vunpack.c.l.b16 %v1223
        %v1290 = vunpack.c.h.b16 %v1223
        %v1291 = vunpack.c.l.b16 %v1224
        %v1292 = vunpack.c.h.b16 %v1224
        %v1293 = vunpack.c.l.b16 %v1225
        %v1294 = vunpack.c.h.b16 %v1225
        %v1295 = vunpack.c.l.b16 %v1226
        %v1296 = vunpack.c.h.b16 %v1226
        %v1297 = vunpack.c.l.b16 %v1227
        %v1298 = vunpack.c.h.b16 %v1227
        %v1299 = vunpack.c.l.b16 %v1228
        %v1300 = vunpack.c.h.b16 %v1228
        %v1301 = vunpack.c.l.b16 %v1229
        %v1302 = vunpack.c.h.b16 %v1229
        %v1303 = vunpack.c.l.b16 %v1230
        %v1304 = vunpack.c.h.b16 %v1230
        %v1305 = vunpack.c.l.b16 %v1231
        %v1306 = vunpack.c.h.b16 %v1231
        %v1307 = vunpack.c.l.b16 %v1232
        %v1308 = vunpack.c.h.b16 %v1232
        %v1309 = vunpack.c.l.b16 %v1233
        %v1310 = vunpack.c.h.b16 %v1233
        %v1311 = vunpack.c.l.b16 %v1234
        %v1312 = vunpack.c.h.b16 %v1234
        %v1313 = vunpack.c.l.b16 %v1235
        %v1314 = vunpack.c.h.b16 %v1235
        %v1315 = vunpack.c.l.b16 %v1236
        %v1316 = vunpack.c.h.b16 %v1236
        %v1317 = vunpack.c.l.b16 %v1237
        %v1318 = vunpack.c.h.b16 %v1237
        %v1319 = vunpack.c.l.b16 %v1238
        %v1320 = vunpack.c.h.b16 %v1238
        %v1321 = vunpack.c.l.b16 %v1239
        %v1322 = vunpack.c.h.b16 %v1239
        %v1323 = vunpack.c.l.b16 %v1240
        %v1324 = vunpack.c.h.b16 %v1240
        %v1325 = vunpack.c.l.b16 %v1241
        %v1326 = vunpack.c.h.b16 %v1241
        %v1327 = vunpack.c.l.b16 %v1242
        %v1328 = vunpack.c.h.b16 %v1242
        %v1329 = vunpack.c.l.b16 %v1243
        %v1330 = vunpack.c.h.b16 %v1243
        %v1331 = vunpack.c.l.b16 %v1244
        %v1332 = vunpack.c.h.b16 %v1244
        %v1333 = vunpack.c.l.b16 %v1245
        %v1334 = vunpack.c.h.b16 %v1245
        %v1335 = vunpack.c.l.b16 %v1246
        %v1336 = vunpack.c.h.b16 %v1246
        %v1337 = vunpack.c.l.b16 %v1247
        %v1338 = vunpack.c.h.b16 %v1247
        %v1339 = vunpack.c.l.b16 %v1248
        %v1340 = vunpack.c.h.b16 %v1248
        %v1341 = vunpack.c.l.b16 %v1249
        %v1342 = vunpack.c.h.b16 %v1249
        %v1343 = vunpack.c.l.b16 %v1250
        %v1344 = vunpack.c.h.b16 %v1250
        %v1345 = vunpack.c.l.b16 %v1251
        %v1346 = vunpack.c.h.b16 %v1251
        %v1347 = vunpack.c.l.b16 %v1252
        %v1348 = vunpack.c.h.b16 %v1252
        %v1349 = vpack.c.b16 %v1289, %v1285
        %v1350 = vpack.c.b16 %v1290, %v1286
        %v1351 = vpack.c.b16 %v1291, %v1287
        %v1352 = vpack.c.b16 %v1292, %v1288
        %v1353 = vpack.c.b16 %v1297, %v1293
        %v1354 = vpack.c.b16 %v1298, %v1294
        %v1355 = vpack.c.b16 %v1299, %v1295
        %v1356 = vpack.c.b16 %v1300, %v1296
        %v1357 = vpack.c.b16 %v1305, %v1301
        %v1358 = vpack.c.b16 %v1306, %v1302
        %v1359 = vpack.c.b16 %v1307, %v1303
        %v1360 = vpack.c.b16 %v1308, %v1304
        %v1361 = vpack.c.b16 %v1313, %v1309
        %v1362 = vpack.c.b16 %v1314, %v1310
        %v1363 = vpack.c.b16 %v1315, %v1311
        %v1364 = vpack.c.b16 %v1316, %v1312
        %v1365 = vpack.c.b16 %v1321, %v1317
        %v1366 = vpack.c.b16 %v1322, %v1318
        %v1367 = vpack.c.b16 %v1323, %v1319
        %v1368 = vpack.c.b16 %v1324, %v1320
        %v1369 = vpack.c.b16 %v1329, %v1325
        %v1370 = vpack.c.b16 %v1330, %v1326
        %v1371 = vpack.c.b16 %v1331, %v1327
        %v1372 = vpack.c.b16 %v1332, %v1328
        %v1373 = vpack.c.b16 %v1337, %v1333
        %v1374 = vpack.c.b16 %v1338, %v1334
        %v1375 = vpack.c.b16 %v1339, %v1335
        %v1376 = vpack.c.b16 %v1340, %v1336
        %v1377 = vpack.c.b16 %v1345, %v1341
        %v1378 = vpack.c.b16 %v1346, %v1342
        %v1379 = vpack.c.b16 %v1347, %v1343
        %v1380 = vpack.c.b16 %v1348, %v1344
        %1413 = vmatpush.bf16.msra.mxu0 %v1377
        %1414 = vmatpush.bf16.msra.mxu0 %v1373
        %1415 = vmatpush.bf16.msra.mxu0 %v1369
        %1416 = vmatpush.bf16.msra.mxu0 %v1365
        %1417 = vmatpush.bf16.msra.mxu0 %v1361
        %1418 = vmatpush.bf16.msra.mxu0 %v1357
        %1419 = vmatpush.bf16.msra.mxu0 %v1353
        %1420 = vmatpush.bf16.msra.mxu0 %v1349
        %1421 = vmatmul.bf16.gmra.mxu0 %v1220
        %v1422 = vpop.f32.mrf.mxu0
        %v1423 = vadd.f32 0.0, %v1422
        %v1424 = vpop.f32.mrf.mxu0
        %1425 = vdwg.mxu0
        %1426 = vmatpush.bf16.msra.mxu0 %v1378
        %1427 = vmatpush.bf16.msra.mxu0 %v1374
        %1428 = vmatpush.bf16.msra.mxu0 %v1370
        %1429 = vmatpush.bf16.msra.mxu0 %v1366
        %1430 = vmatpush.bf16.msra.mxu0 %v1362
        %1431 = vmatpush.bf16.msra.mxu0 %v1358
        %1432 = vmatpush.bf16.msra.mxu0 %v1354
        %1433 = vmatpush.bf16.msra.mxu0 %v1350
        %1434 = vmatmul.bf16.gmra.mxu0 %v1220
        %v1435 = vpop.f32.mrf.mxu0
        %v1436 = vadd.f32 0.0, %v1435
        %v1437 = vpop.f32.mrf.mxu0
        %1438 = vdwg.mxu0
        %1439 = vmatpush.bf16.msra.mxu0 %v1379
        %1440 = vmatpush.bf16.msra.mxu0 %v1375
        %1441 = vmatpush.bf16.msra.mxu0 %v1371
        %1442 = vmatpush.bf16.msra.mxu0 %v1367
        %1443 = vmatpush.bf16.msra.mxu0 %v1363
        %1444 = vmatpush.bf16.msra.mxu0 %v1359
        %1445 = vmatpush.bf16.msra.mxu0 %v1355
        %1446 = vmatpush.bf16.msra.mxu0 %v1351
        %1447 = vmatmul.bf16.gmra.mxu0 %v1220
        %v1448 = vpop.f32.mrf.mxu0
        %v1449 = vadd.f32 0.0, %v1448
        %v1450 = vpop.f32.mrf.mxu0
        %1451 = vdwg.mxu0
        %1452 = vmatpush.bf16.msra.mxu0 %v1380
        %1453 = vmatpush.bf16.msra.mxu0 %v1376
        %1454 = vmatpush.bf16.msra.mxu0 %v1372
        %1455 = vmatpush.bf16.msra.mxu0 %v1368
        %1456 = vmatpush.bf16.msra.mxu0 %v1364
        %1457 = vmatpush.bf16.msra.mxu0 %v1360
        %1458 = vmatpush.bf16.msra.mxu0 %v1356
        %1459 = vmatpush.bf16.msra.mxu0 %v1352
        %1460 = vmatmul.bf16.gmra.mxu0 %v1220
        %v1461 = vpop.f32.mrf.mxu0
        %v1462 = vadd.f32 0.0, %v1461
        %v1463 = vpop.f32.mrf.mxu0
        %1464 = vdwg.mxu0
        %v1465 = vadd.f32 %v1216, %v1423
        %v1466 = vadd.f32 %v1217, %v1436
        %v1467 = vadd.f32 %v1218, %v1449
        %v1468 = vadd.f32 %v1219, %v1462
        %v1469 = vxor.u32 %v1465, 2147483648
        %v1470 = vmul.f32 %v1469, 1.442695
        %v1471 = vpow.pop %v1470
        %v1472 = vadd.f32 %v1471, 1.0
        %v1473 = vrcp.pop %v1472
        %v1474 = vmul.f32 %v1472, %v1473
        %v1475 = vsub.f32 1.0, %v1474
        %v1476 = vmul.f32 %v1473, %v1475
        %v1477 = vadd.f32 %v1473, %v1476
        %vm1478 = vweird.f32 %v1472
        %vm1479 = vweird.f32 %v1473
        %vm1480 = vmor %vm1478, %vm1479
        %v1481 = vsel %vm1480, %v1473, %v1477
        %v1482 = vand.u32 2147483647, %v1472
        %vm1483 = vcmp.eq.f32.partialorder %v1482, 8.507059e+37
        %v1484 = vand.u32 %v1472, 2147483648
        %v1485 = vor.u32 1.1754944e-38, %v1484
        %v1486 = vsel %vm1483, %v1485, %v1481
        %v1487 = vmul.f32 1.0, %v1486
        %v1488 = vxor.u32 %v1466, 2147483648
        %v1489 = vmul.f32 %v1488, 1.442695
        %v1490 = vpow.pop %v1489
        %v1491 = vadd.f32 %v1490, 1.0
        %v1492 = vrcp.pop %v1491
        %v1493 = vmul.f32 %v1491, %v1492
        %v1494 = vsub.f32 1.0, %v1493
        %v1495 = vmul.f32 %v1492, %v1494
        %v1496 = vadd.f32 %v1492, %v1495
        %vm1497 = vweird.f32 %v1491
        %vm1498 = vweird.f32 %v1492
        %vm1499 = vmor %vm1497, %vm1498
        %v1500 = vsel %vm1499, %v1492, %v1496
        %v1501 = vand.u32 2147483647, %v1491
        %vm1502 = vcmp.eq.f32.partialorder %v1501, 8.507059e+37
        %v1503 = vand.u32 %v1491, 2147483648
        %v1504 = vor.u32 1.1754944e-38, %v1503
        %v1505 = vsel %vm1502, %v1504, %v1500
        %v1506 = vmul.f32 1.0, %v1505
        %v1507 = vtanh.pop %v1467
        %v1508 = vxor.u32 %v1468, 2147483648
        %v1509 = vmul.f32 %v1508, 1.442695
        %v1510 = vpow.pop %v1509
        %v1511 = vadd.f32 %v1510, 1.0
        %v1512 = vrcp.pop %v1511
        %v1513 = vmul.f32 %v1511, %v1512
        %v1514 = vsub.f32 1.0, %v1513
        %v1515 = vmul.f32 %v1512, %v1514
        %v1516 = vadd.f32 %v1512, %v1515
        %vm1517 = vweird.f32 %v1511
        %vm1518 = vweird.f32 %v1512
        %vm1519 = vmor %vm1517, %vm1518
        %v1520 = vsel %vm1519, %v1512, %v1516
        %v1521 = vand.u32 2147483647, %v1511
        %vm1522 = vcmp.eq.f32.partialorder %v1521, 8.507059e+37
        %v1523 = vand.u32 %v1511, 2147483648
        %v1524 = vor.u32 1.1754944e-38, %v1523
        %v1525 = vsel %vm1522, %v1524, %v1520
        %v1526 = vmul.f32 1.0, %v1525
        %v1527 = vmul.f32 %v1506, %v1211
        %v1528 = vmul.f32 %v1487, %v1507
        %v1529 = vadd.f32 %v1527, %v1528
        %v1530 = vtanh.pop %v1529
        %v1531 = vmul.f32 %v1526, %v1530
        %1532 = vset.pattern.permute.xlu0 2
        %1533 = vperm.xlu0 %1532, %v880
        %v1534 = vpop.permute.xlu0 %1533
        %vm1535 = vcmp.eq.s32.totalorder %v1534, 1
        %v1536 = vsel %vm1535, %v1531, %v1210
        %v1537 = vsel %vm1535, %v1529, %v1211
        %v1538 = vsel %vm1535, %v1531, 0.0
        %s1539 = scalar_lea.vmem %s363, 16 [#allocation11]
        %1540 = vst [vmem:[%s1539] sm:$0xff] %v1538
        %s1541 = scalar_lea.vmem [#allocation2], 96
        %v1542 = vld [vmem:[%s1541] sm:$0xff]
        %v1543 = vld [vmem:[%s1541 + $0x8] sm:$0xff]
        %v1544 = vld [vmem:[%s1541 + $0x10] sm:$0xff]
        %v1545 = vld [vmem:[%s1541 + $0x18] sm:$0xff]
        %v1546 = vpack.c.bf16 %v1536, %v1536
        %v1547 = vld [vmem:[#allocation10] sm:$0xff]
        %v1548 = vld [vmem:[#allocation10 + $0x8] sm:$0xff]
        %v1549 = vld [vmem:[#allocation10 + $0x10] sm:$0xff]
        %v1550 = vld [vmem:[#allocation10 + $0x18] sm:$0xff]
        %v1551 = vld [vmem:[#allocation10 + $0x20] sm:$0xff]
        %v1552 = vld [vmem:[#allocation10 + $0x28] sm:$0xff]
        %v1553 = vld [vmem:[#allocation10 + $0x30] sm:$0xff]
        %v1554 = vld [vmem:[#allocation10 + $0x38] sm:$0xff]
        %v1555 = vld [vmem:[#allocation10 + $0x40] sm:$0xff]
        %v1556 = vld [vmem:[#allocation10 + $0x48] sm:$0xff]
        %v1557 = vld [vmem:[#allocation10 + $0x50] sm:$0xff]
        %v1558 = vld [vmem:[#allocation10 + $0x58] sm:$0xff]
        %v1559 = vld [vmem:[#allocation10 + $0x60] sm:$0xff]
        %v1560 = vld [vmem:[#allocation10 + $0x68] sm:$0xff]
        %v1561 = vld [vmem:[#allocation10 + $0x70] sm:$0xff]
        %v1562 = vld [vmem:[#allocation10 + $0x78] sm:$0xff]
        %v1563 = vld [vmem:[#allocation10 + $0x80] sm:$0xff]
        %v1564 = vld [vmem:[#allocation10 + $0x88] sm:$0xff]
        %v1565 = vld [vmem:[#allocation10 + $0x90] sm:$0xff]
        %v1566 = vld [vmem:[#allocation10 + $0x98] sm:$0xff]
        %v1567 = vld [vmem:[#allocation10 + $0xa0] sm:$0xff]
        %v1568 = vld [vmem:[#allocation10 + $0xa8] sm:$0xff]
        %v1569 = vld [vmem:[#allocation10 + $0xb0] sm:$0xff]
        %v1570 = vld [vmem:[#allocation10 + $0xb8] sm:$0xff]
        %v1571 = vld [vmem:[#allocation10 + $0xc0] sm:$0xff]
        %v1572 = vld [vmem:[#allocation10 + $0xc8] sm:$0xff]
        %v1573 = vld [vmem:[#allocation10 + $0xd0] sm:$0xff]
        %v1574 = vld [vmem:[#allocation10 + $0xd8] sm:$0xff]
        %v1575 = vld [vmem:[#allocation10 + $0xe0] sm:$0xff]
        %v1576 = vld [vmem:[#allocation10 + $0xe8] sm:$0xff]
        %v1577 = vld [vmem:[#allocation10 + $0xf0] sm:$0xff]
        %v1578 = vld [vmem:[#allocation10 + $0xf8] sm:$0xff]
        %v1611 = vunpack.c.l.b16 %v1547
        %v1612 = vunpack.c.h.b16 %v1547
        %v1613 = vunpack.c.l.b16 %v1548
        %v1614 = vunpack.c.h.b16 %v1548
        %v1615 = vunpack.c.l.b16 %v1549
        %v1616 = vunpack.c.h.b16 %v1549
        %v1617 = vunpack.c.l.b16 %v1550
        %v1618 = vunpack.c.h.b16 %v1550
        %v1619 = vunpack.c.l.b16 %v1551
        %v1620 = vunpack.c.h.b16 %v1551
        %v1621 = vunpack.c.l.b16 %v1552
        %v1622 = vunpack.c.h.b16 %v1552
        %v1623 = vunpack.c.l.b16 %v1553
        %v1624 = vunpack.c.h.b16 %v1553
        %v1625 = vunpack.c.l.b16 %v1554
        %v1626 = vunpack.c.h.b16 %v1554
        %v1627 = vunpack.c.l.b16 %v1555
        %v1628 = vunpack.c.h.b16 %v1555
        %v1629 = vunpack.c.l.b16 %v1556
        %v1630 = vunpack.c.h.b16 %v1556
        %v1631 = vunpack.c.l.b16 %v1557
        %v1632 = vunpack.c.h.b16 %v1557
        %v1633 = vunpack.c.l.b16 %v1558
        %v1634 = vunpack.c.h.b16 %v1558
        %v1635 = vunpack.c.l.b16 %v1559
        %v1636 = vunpack.c.h.b16 %v1559
        %v1637 = vunpack.c.l.b16 %v1560
        %v1638 = vunpack.c.h.b16 %v1560
        %v1639 = vunpack.c.l.b16 %v1561
        %v1640 = vunpack.c.h.b16 %v1561
        %v1641 = vunpack.c.l.b16 %v1562
        %v1642 = vunpack.c.h.b16 %v1562
        %v1643 = vunpack.c.l.b16 %v1563
        %v1644 = vunpack.c.h.b16 %v1563
        %v1645 = vunpack.c.l.b16 %v1564
        %v1646 = vunpack.c.h.b16 %v1564
        %v1647 = vunpack.c.l.b16 %v1565
        %v1648 = vunpack.c.h.b16 %v1565
        %v1649 = vunpack.c.l.b16 %v1566
        %v1650 = vunpack.c.h.b16 %v1566
        %v1651 = vunpack.c.l.b16 %v1567
        %v1652 = vunpack.c.h.b16 %v1567
        %v1653 = vunpack.c.l.b16 %v1568
        %v1654 = vunpack.c.h.b16 %v1568
        %v1655 = vunpack.c.l.b16 %v1569
        %v1656 = vunpack.c.h.b16 %v1569
        %v1657 = vunpack.c.l.b16 %v1570
        %v1658 = vunpack.c.h.b16 %v1570
        %v1659 = vunpack.c.l.b16 %v1571
        %v1660 = vunpack.c.h.b16 %v1571
        %v1661 = vunpack.c.l.b16 %v1572
        %v1662 = vunpack.c.h.b16 %v1572
        %v1663 = vunpack.c.l.b16 %v1573
        %v1664 = vunpack.c.h.b16 %v1573
        %v1665 = vunpack.c.l.b16 %v1574
        %v1666 = vunpack.c.h.b16 %v1574
        %v1667 = vunpack.c.l.b16 %v1575
        %v1668 = vunpack.c.h.b16 %v1575
        %v1669 = vunpack.c.l.b16 %v1576
        %v1670 = vunpack.c.h.b16 %v1576
        %v1671 = vunpack.c.l.b16 %v1577
        %v1672 = vunpack.c.h.b16 %v1577
        %v1673 = vunpack.c.l.b16 %v1578
        %v1674 = vunpack.c.h.b16 %v1578
        %v1675 = vpack.c.b16 %v1615, %v1611
        %v1676 = vpack.c.b16 %v1616, %v1612
        %v1677 = vpack.c.b16 %v1617, %v1613
        %v1678 = vpack.c.b16 %v1618, %v1614
        %v1679 = vpack.c.b16 %v1623, %v1619
        %v1680 = vpack.c.b16 %v1624, %v1620
        %v1681 = vpack.c.b16 %v1625, %v1621
        %v1682 = vpack.c.b16 %v1626, %v1622
        %v1683 = vpack.c.b16 %v1631, %v1627
        %v1684 = vpack.c.b16 %v1632, %v1628
        %v1685 = vpack.c.b16 %v1633, %v1629
        %v1686 = vpack.c.b16 %v1634, %v1630
        %v1687 = vpack.c.b16 %v1639, %v1635
        %v1688 = vpack.c.b16 %v1640, %v1636
        %v1689 = vpack.c.b16 %v1641, %v1637
        %v1690 = vpack.c.b16 %v1642, %v1638
        %v1691 = vpack.c.b16 %v1647, %v1643
        %v1692 = vpack.c.b16 %v1648, %v1644
        %v1693 = vpack.c.b16 %v1649, %v1645
        %v1694 = vpack.c.b16 %v1650, %v1646
        %v1695 = vpack.c.b16 %v1655, %v1651
        %v1696 = vpack.c.b16 %v1656, %v1652
        %v1697 = vpack.c.b16 %v1657, %v1653
        %v1698 = vpack.c.b16 %v1658, %v1654
        %v1699 = vpack.c.b16 %v1663, %v1659
        %v1700 = vpack.c.b16 %v1664, %v1660
        %v1701 = vpack.c.b16 %v1665, %v1661
        %v1702 = vpack.c.b16 %v1666, %v1662
        %v1703 = vpack.c.b16 %v1671, %v1667
        %v1704 = vpack.c.b16 %v1672, %v1668
        %v1705 = vpack.c.b16 %v1673, %v1669
        %v1706 = vpack.c.b16 %v1674, %v1670
        %1739 = vmatpush.bf16.msra.mxu0 %v1703
        %1740 = vmatpush.bf16.msra.mxu0 %v1699
        %1741 = vmatpush.bf16.msra.mxu0 %v1695
        %1742 = vmatpush.bf16.msra.mxu0 %v1691
        %1743 = vmatpush.bf16.msra.mxu0 %v1687
        %1744 = vmatpush.bf16.msra.mxu0 %v1683
        %1745 = vmatpush.bf16.msra.mxu0 %v1679
        %1746 = vmatpush.bf16.msra.mxu0 %v1675
        %1747 = vmatmul.bf16.gmra.mxu0 %v1546
        %v1748 = vpop.f32.mrf.mxu0
        %v1749 = vadd.f32 0.0, %v1748
        %v1750 = vpop.f32.mrf.mxu0
        %1751 = vdwg.mxu0
        %1752 = vmatpush.bf16.msra.mxu0 %v1704
        %1753 = vmatpush.bf16.msra.mxu0 %v1700
        %1754 = vmatpush.bf16.msra.mxu0 %v1696
        %1755 = vmatpush.bf16.msra.mxu0 %v1692
        %1756 = vmatpush.bf16.msra.mxu0 %v1688
        %1757 = vmatpush.bf16.msra.mxu0 %v1684
        %1758 = vmatpush.bf16.msra.mxu0 %v1680
        %1759 = vmatpush.bf16.msra.mxu0 %v1676
        %1760 = vmatmul.bf16.gmra.mxu0 %v1546
        %v1761 = vpop.f32.mrf.mxu0
        %v1762 = vadd.f32 0.0, %v1761
        %v1763 = vpop.f32.mrf.mxu0
        %1764 = vdwg.mxu0
        %1765 = vmatpush.bf16.msra.mxu0 %v1705
        %1766 = vmatpush.bf16.msra.mxu0 %v1701
        %1767 = vmatpush.bf16.msra.mxu0 %v1697
        %1768 = vmatpush.bf16.msra.mxu0 %v1693
        %1769 = vmatpush.bf16.msra.mxu0 %v1689
        %1770 = vmatpush.bf16.msra.mxu0 %v1685
        %1771 = vmatpush.bf16.msra.mxu0 %v1681
        %1772 = vmatpush.bf16.msra.mxu0 %v1677
        %1773 = vmatmul.bf16.gmra.mxu0 %v1546
        %v1774 = vpop.f32.mrf.mxu0
        %v1775 = vadd.f32 0.0, %v1774
        %v1776 = vpop.f32.mrf.mxu0
        %1777 = vdwg.mxu0
        %1778 = vmatpush.bf16.msra.mxu0 %v1706
        %1779 = vmatpush.bf16.msra.mxu0 %v1702
        %1780 = vmatpush.bf16.msra.mxu0 %v1698
        %1781 = vmatpush.bf16.msra.mxu0 %v1694
        %1782 = vmatpush.bf16.msra.mxu0 %v1690
        %1783 = vmatpush.bf16.msra.mxu0 %v1686
        %1784 = vmatpush.bf16.msra.mxu0 %v1682
        %1785 = vmatpush.bf16.msra.mxu0 %v1678
        %1786 = vmatmul.bf16.gmra.mxu0 %v1546
        %v1787 = vpop.f32.mrf.mxu0
        %v1788 = vadd.f32 0.0, %v1787
        %v1789 = vpop.f32.mrf.mxu0
        %1790 = vdwg.mxu0
        %v1791 = vadd.f32 %v1542, %v1749
        %v1792 = vadd.f32 %v1543, %v1762
        %v1793 = vadd.f32 %v1544, %v1775
        %v1794 = vadd.f32 %v1545, %v1788
        %v1795 = vxor.u32 %v1791, 2147483648
        %v1796 = vmul.f32 %v1795, 1.442695
        %v1797 = vpow.pop %v1796
        %v1798 = vadd.f32 %v1797, 1.0
        %v1799 = vrcp.pop %v1798
        %v1800 = vmul.f32 %v1798, %v1799
        %v1801 = vsub.f32 1.0, %v1800
        %v1802 = vmul.f32 %v1799, %v1801
        %v1803 = vadd.f32 %v1799, %v1802
        %vm1804 = vweird.f32 %v1798
        %vm1805 = vweird.f32 %v1799
        %vm1806 = vmor %vm1804, %vm1805
        %v1807 = vsel %vm1806, %v1799, %v1803
        %v1808 = vand.u32 2147483647, %v1798
        %vm1809 = vcmp.eq.f32.partialorder %v1808, 8.507059e+37
        %v1810 = vand.u32 %v1798, 2147483648
        %v1811 = vor.u32 1.1754944e-38, %v1810
        %v1812 = vsel %vm1809, %v1811, %v1807
        %v1813 = vmul.f32 1.0, %v1812
        %v1814 = vxor.u32 %v1792, 2147483648
        %v1815 = vmul.f32 %v1814, 1.442695
        %v1816 = vpow.pop %v1815
        %v1817 = vadd.f32 %v1816, 1.0
        %v1818 = vrcp.pop %v1817
        %v1819 = vmul.f32 %v1817, %v1818
        %v1820 = vsub.f32 1.0, %v1819
        %v1821 = vmul.f32 %v1818, %v1820
        %v1822 = vadd.f32 %v1818, %v1821
        %vm1823 = vweird.f32 %v1817
        %vm1824 = vweird.f32 %v1818
        %vm1825 = vmor %vm1823, %vm1824
        %v1826 = vsel %vm1825, %v1818, %v1822
        %v1827 = vand.u32 2147483647, %v1817
        %vm1828 = vcmp.eq.f32.partialorder %v1827, 8.507059e+37
        %v1829 = vand.u32 %v1817, 2147483648
        %v1830 = vor.u32 1.1754944e-38, %v1829
        %v1831 = vsel %vm1828, %v1830, %v1826
        %v1832 = vmul.f32 1.0, %v1831
        %v1833 = vtanh.pop %v1793
        %v1834 = vxor.u32 %v1794, 2147483648
        %v1835 = vmul.f32 %v1834, 1.442695
        %v1836 = vpow.pop %v1835
        %v1837 = vadd.f32 %v1836, 1.0
        %v1838 = vrcp.pop %v1837
        %v1839 = vmul.f32 %v1837, %v1838
        %v1840 = vsub.f32 1.0, %v1839
        %v1841 = vmul.f32 %v1838, %v1840
        %v1842 = vadd.f32 %v1838, %v1841
        %vm1843 = vweird.f32 %v1837
        %vm1844 = vweird.f32 %v1838
        %vm1845 = vmor %vm1843, %vm1844
        %v1846 = vsel %vm1845, %v1838, %v1842
        %v1847 = vand.u32 2147483647, %v1837
        %vm1848 = vcmp.eq.f32.partialorder %v1847, 8.507059e+37
        %v1849 = vand.u32 %v1837, 2147483648
        %v1850 = vor.u32 1.1754944e-38, %v1849
        %v1851 = vsel %vm1848, %v1850, %v1846
        %v1852 = vmul.f32 1.0, %v1851
        %v1853 = vmul.f32 %v1832, %v1537
        %v1854 = vmul.f32 %v1813, %v1833
        %v1855 = vadd.f32 %v1853, %v1854
        %v1856 = vtanh.pop %v1855
        %v1857 = vmul.f32 %v1852, %v1856
        %1858 = vset.pattern.permute.xlu0 3
        %1859 = vperm.xlu0 %1858, %v880
        %v1860 = vpop.permute.xlu0 %1859
        %vm1861 = vcmp.eq.s32.totalorder %v1860, 1
        %v1862 = vsel %vm1861, %v1857, %v1536
        %v1863 = vsel %vm1861, %v1855, %v1537
        %v1864 = vsel %vm1861, %v1857, 0.0
        %s1865 = scalar_lea.vmem %s363, 24 [#allocation11]
        %1866 = vst [vmem:[%s1865] sm:$0xff] %v1864
        %p1867 = scmp.lt.s32.totalorder %s32, 1
        // Predicated region
        $region57: #{lstm_pallas.1} parent=39 // pred_check
          %p1868 = pneg %p1867
        $region58: #{lstm_pallas.1} parent=39 // pred_check_branch
          %1870 = sbr.rel (%p1868) target = $region60
        $region59: #{lstm_pallas.1} parent=39 // pred_region
          %1871 = vst [vmem:[#allocation3] sm:$0xff] %v1862
          %1872 = vst [vmem:[#allocation4] sm:$0xff] %v1863
        $region60: #{lstm_pallas.1} parent=39 // pred_fallthru
          _
        %p1873 = scmp.eq.s32.totalorder %s32, 1
        // Predicated region
        $region61: #{lstm_pallas.1} parent=39 // pred_check
          %p1874 = pneg %p1873
        $region62: #{lstm_pallas.1} parent=39 // pred_check_branch
          %1876 = sbr.rel (%p1874) target = $region64
        $region63: #{lstm_pallas.1} parent=39 // pred_region
          %1877 = vst [vmem:[#allocation12] sm:$0xff] %v1862
          %1878 = vst [vmem:[#allocation14] sm:$0xff] %v1863
        $region64: #{lstm_pallas.1} parent=39 // pred_fallthru
          _
        %s1879 = sand.u32 %s166, 1
        %s1880 = scalar_lea.sflag [#allocation7], %s1879
        %s1881 = sand.u32 %s166, 1
        %s1882 = smul.addr %s1881, 32
        %s1883 = scalar_lea.vmem [#allocation11], %s1882
        // Predicated region
        $region65: #{lstm_pallas.1} parent=39 // pred_check
          %p1884 = pneg %p176
        $region66: #{lstm_pallas.1} parent=39 // pred_check_branch
          %1886 = sbr.rel (%p1884) target = $region68
        $region67: #{lstm_pallas.1} parent=39 // pred_region
          %s1887 = smul.u32 4, %s32
          %1889 = vsyncadd %s1880, 0
          %s1890 = sadd.s32 %s31, %s1887
          %s1891 = smul.addr %s1890, 8
          %s1892 = scalar_lea.hbm %s5, %s1891
          %s1893 = sshll.u32 %s1883, 4
          %s1894 = int_to_ptr.vmem [resolvable:$true] %s1893
          %s1895 = sshll.u32 %s1892, 4
          %s1896 = int_to_ptr.hbm [resolvable:$true] %s1895
          %1901 = dma.vmem_to_hbm [thread:$0]  %s1894, 512, %s1896, %s1880, 128, 128, 8
        $region68: #{lstm_pallas.1} parent=39 // pred_fallthru
          _
        // Predicated region
        $region69: #{lstm_pallas.1} parent=39 // pred_check
          %p1902 = pneg %p202
        $region70: #{lstm_pallas.1} parent=39 // pred_check_branch
          %1904 = sbr.rel (%p1902) target = $region72
        $region71: #{lstm_pallas.1} parent=39 // pred_region
          %1906 = vsyncadd [#allocation13], 0
          %s1907 = smul.addr %s31, 8
          %s1908 = scalar_lea.hbm %s6, %s1907
          %s1910 = sshll.u32 [#allocation12], 4
          %s1911 = int_to_ptr.vmem [resolvable:$true] %s1910
          %s1912 = sshll.u32 %s1908, 4
          %s1913 = int_to_ptr.hbm [resolvable:$true] %s1912
          %1915 = dma.vmem_to_hbm [thread:$0]  %s1911, 128, %s1913, [#allocation13]
        $region72: #{lstm_pallas.1} parent=39 // pred_fallthru
          _
        // Predicated region
        $region73: #{lstm_pallas.1} parent=39 // pred_check
          %p1916 = pneg %p228
        $region74: #{lstm_pallas.1} parent=39 // pred_check_branch
          %1918 = sbr.rel (%p1916) target = $region76
        $region75: #{lstm_pallas.1} parent=39 // pred_region
          %1920 = vsyncadd [#allocation13], 0
          %s1921 = smul.addr %s31, 8
          %s1922 = scalar_lea.hbm %s7, %s1921
          %s1924 = sshll.u32 [#allocation14], 4
          %s1925 = int_to_ptr.vmem [resolvable:$true] %s1924
          %s1926 = sshll.u32 %s1922, 4
          %s1927 = int_to_ptr.hbm [resolvable:$true] %s1926
          %1929 = dma.vmem_to_hbm [thread:$0]  %s1925, 128, %s1927, [#allocation13]
        $region76: #{lstm_pallas.1} parent=39 // pred_fallthru
          _
        // Predicated region
        $region77: #{lstm_pallas.1} parent=39 // pred_check
          %p1930 = pneg %p202
        $region78: #{lstm_pallas.1} parent=39 // pred_check_branch
          %1932 = sbr.rel (%p1930) target = $region80
        $region79: #{lstm_pallas.1} parent=39 // pred_region
          %1934 = dma.done [#allocation13], 128
        $region80: #{lstm_pallas.1} parent=39 // pred_fallthru
          _
        // Predicated region
        $region81: #{lstm_pallas.1} parent=39 // pred_check
          %p1935 = pneg %p228
        $region82: #{lstm_pallas.1} parent=39 // pred_check_branch
          %1937 = sbr.rel (%p1935) target = $region84
        $region83: #{lstm_pallas.1} parent=39 // pred_region
          %1939 = dma.done [#allocation13], 128
        $region84: #{lstm_pallas.1} parent=39 // pred_fallthru
          _
      $region40: #{lstm_pallas.1} parent=5 // pred_fallthru
        _
      %p1940 = scmp.le.s32.totalorder 2, %s22
      // Predicated region
      $region85: #{lstm_pallas.1} parent=5 // pred_check
        %p1941 = pneg %p1940
      $region86: #{lstm_pallas.1} parent=5 // pred_check_branch
        %1943 = sbr.rel (%p1941) target = $region88
      $region87: #{lstm_pallas.1} parent=5 // pred_region
        %s1944 = ssub.s32 %s22, 2
        // Predicated region
        $region89: #{lstm_pallas.1} parent=87 // pred_check
          %p1945 = pneg %p182
        $region90: #{lstm_pallas.1} parent=87 // pred_check_branch
          %1947 = sbr.rel (%p1945) target = $region92
        $region91: #{lstm_pallas.1} parent=87 // pred_region
          %s1948 = sand.u32 %s167, 1
          %s1949 = scalar_lea.sflag [#allocation7], %s1948
          %s1950 = sand.u32 %s167, 1
          %s1951 = smul.addr %s1950, 32
          %s1952 = scalar_lea.vmem [#allocation11], %s1951
          %1954 = dma.done %s1949, 512
        $region92: #{lstm_pallas.1} parent=87 // pred_fallthru
          _
      $region88: #{lstm_pallas.1} parent=5 // pred_fallthru
        _
    $region6: #{lstm_pallas.1} parent=1 // loop_footer
      %s26 = sadd.s32 1, %s22
    $region7: #{lstm_pallas.1} parent=1 // loop_footer_branch
      %21 = sbr.rel target = $region3
    $region8: #{lstm_pallas.1} parent=1 // loop_exit
      _
    %1955 = vsyncpa [#allocation6], 1
    %s1956 = scalar_lea.sflag [#allocation6], 1
    %1957 = vsyncpa %s1956, 1
    %1958 = vsyncpa [#allocation9], 1
    %1959 = vsyncpa [#allocation7], 1
    %s1960 = scalar_lea.sflag [#allocation7], 1
    %1961 = vsyncpa %s1960, 1
    %1962 = vsyncpa [#allocation13], 1

</llo_original>
